<compile_context>
chip_gen: v7x
topology: tpu7x:2x2x1
jax: 0.10.0
libtpu: 0.0.40
codegen_flags: <defaults>
</compile_context>

<pallas_src>
import functools

import jax
import jax.numpy as jnp
from jax.experimental import pallas as pl
from jax.experimental.pallas import tpu as pltpu


def _round_up(x, m):
    return (x + m - 1) // m * m


# ---------------------------------------------------------------------------
# Pass A (fused, stride==1): conv taps + bf16 Y store + BN-stat accumulation.
#   x0_ref, x1_ref : (rows, Cin) bf16  current / next flat row tile (halo source)
#   w_ref          : (KH*KW, Cin, Cpad) bf16 tap weights (resident)
#   c_ref          : (1, Cpad) f32 analytic per-channel shift ~E[y]
#   mask_ref       : (rows, 1) f32 validity mask (padded rows/cols -> 0)
#   y_ref          : (rows, Cpad) bf16 conv output tile
#   sum_ref/ssq_ref: (1, 1, Cpad) f32 per-sample accumulators (resident over r)
# ---------------------------------------------------------------------------
def _fused_conv_stats_kernel(x0_ref, x1_ref, w_ref, c_ref, mask_ref,
                             y_ref, sum_ref, ssq_ref, *, offsets, rows):
    @pl.when(pl.program_id(1) == 0)
    def _init():
        sum_ref[...] = jnp.zeros_like(sum_ref)
        ssq_ref[...] = jnp.zeros_like(ssq_ref)

    # Current row tile + next row tile (supplies the halo).  Cast to f32 before
    # the unaligned per-tap sublane slices so they stay on the simple relayout
    # path; the MXU inputs are re-cast to bf16 per tap (lossless round trip).
    xx = jnp.concatenate(
        [x0_ref[...].astype(jnp.float32), x1_ref[...].astype(jnp.float32)], axis=0)

    cpad = w_ref.shape[-1]
    acc = jnp.zeros((rows, cpad), jnp.float32)
    for t, off in enumerate(offsets):               # static unroll over KH*KW taps
        xs = xx[off:off + rows, :].astype(jnp.bfloat16)
        acc = acc + jnp.dot(xs, w_ref[t], preferred_element_type=jnp.float32)

    y_ref[...] = acc.astype(y_ref.dtype)            # store Y once (bf16) for pass B

    ym = (acc - c_ref[...]) * mask_ref[...]         # shifted + masked stats
    sum_ref[...] += jnp.sum(ym, axis=0, keepdims=True)[None]
    ssq_ref[...] += jnp.sum(ym * ym, axis=0, keepdims=True)[None]


# ---------------------------------------------------------------------------
# Pass A (fallback, stride != 1): im2col patches, single matmul + store Y.
# ---------------------------------------------------------------------------
def _matmul_stats_kernel(p_ref, w_ref, c_ref, mask_ref, y_ref, sum_ref, ssq_ref):
    @pl.when(pl.program_id(0) == 0)
    def _init():
        sum_ref[...] = jnp.zeros_like(sum_ref)
        ssq_ref[...] = jnp.zeros_like(ssq_ref)

    y = jnp.dot(p_ref[...], w_ref[...], preferred_element_type=jnp.float32)
    y_ref[...] = y.astype(y_ref.dtype)
    ym = (y - c_ref[...]) * mask_ref[...]
    sum_ref[...] += jnp.sum(ym, axis=0, keepdims=True)
    ssq_ref[...] += jnp.sum(ym * ym, axis=0, keepdims=True)


# ---------------------------------------------------------------------------
# Pass B: pure element-wise BN affine + LeakyReLU on stored bf16 Y.
# ---------------------------------------------------------------------------
def _bn_act_kernel(y_ref, scale_ref, shift_ref, o_ref, *, neg_slope):
    z = y_ref[...].astype(jnp.float32) * scale_ref[...] + shift_ref[...]
    o_ref[...] = jnp.maximum(z, neg_slope * z).astype(o_ref.dtype)


def _bn_act(y2d, scale, shift, rows_b, neg_slope, vmem_limit):
    tot, cpad = y2d.shape
    return pl.pallas_call(
        functools.partial(_bn_act_kernel, neg_slope=neg_slope),
        out_shape=jax.ShapeDtypeStruct((tot, cpad), jnp.bfloat16),
        grid=(tot // rows_b,),
        in_specs=[pl.BlockSpec((rows_b, cpad), lambda i: (i, 0)),
                  pl.BlockSpec((1, cpad), lambda i: (0, 0)),
                  pl.BlockSpec((1, cpad), lambda i: (0, 0))],
        out_specs=pl.BlockSpec((rows_b, cpad), lambda i: (i, 0)),
        compiler_params=pltpu.CompilerParams(
            dimension_semantics=("parallel",), vmem_limit_bytes=vmem_limit),
    )(y2d, scale, shift)


def _finalize_scale_shift(psum, pssq, c_shift, gamma, beta, m, eps, cout, cpad):
    """Merge per-sample partial (shifted) sums into the fused BN scale/shift."""
    s1 = jnp.sum(psum.reshape(-1, cpad), axis=0, keepdims=True) / m     # E[y - c]
    s2 = jnp.sum(pssq.reshape(-1, cpad), axis=0, keepdims=True) / m     # E[(y - c)^2]
    var = jnp.maximum(s2 - s1 * s1, 0.0)
    inv_std = jax.lax.rsqrt(var + eps)
    g = jnp.pad(gamma.astype(jnp.float32).reshape(1, cout), ((0, 0), (0, cpad - cout)))
    b = jnp.pad(beta.astype(jnp.float32).reshape(1, cout), ((0, 0), (0, cpad - cout)))
    scale = g * inv_std
    shift = b - (c_shift + s1) * scale
    return scale, shift


def _im2col_nhwc(x_nhwc, kh, kw, stride, padding):
    n, h, w, cin = x_nhwc.shape
    xp = jnp.pad(x_nhwc, ((0, 0), (padding, padding), (padding, padding), (0, 0)))
    oh = (h + 2 * padding - kh) // stride + 1
    ow = (w + 2 * padding - kw) // stride + 1
    cols = [xp[:, i:i + (oh - 1) * stride + 1:stride,
                  j:j + (ow - 1) * stride + 1:stride, :]
            for i in range(kh) for j in range(kw)]
    patches = jnp.concatenate(cols, axis=-1).reshape(n * oh * ow, kh * kw * cin)
    return patches, oh, ow


def cna_forward(x_nchw, weight_oikk, gamma, beta, *, stride=1, padding=None,
                eps=1e-5, neg_slope=0.1, block_rows=1024):
    """Conv2d(no bias) -> BatchNorm2d(batch stats) -> LeakyReLU.  Returns NCHW f32."""
    cout, cin, kh, kw = weight_oikk.shape
    n, _, h, w_in = x_nchw.shape
    if padding is None:
        padding = (kh - 1) // 2

    cpad = _round_up(max(cout, 128), 128)             # lane-dense channel dim
    x_nhwc = jnp.transpose(x_nchw, (0, 2, 3, 1))

    # Analytic per-channel shift c ~= E[conv(x)] (kills single-pass variance
    # cancellation); exact up to zero-padding edge effects, which is enough.
    mean_x = jnp.mean(x_nchw.astype(jnp.float32), axis=(0, 2, 3))
    c_shift = jnp.einsum("oikl,i->o", weight_oikk.astype(jnp.float32), mean_x)
    c_shift = jnp.pad(c_shift.reshape(1, cout), ((0, 0), (0, cpad - cout)))

    vmem_small = 24 << 20                             # pass-B working set is tiny

    if stride == 1:
        # ---------------- fused conv-tap path (no im2col) ----------------
        oh = h + 2 * padding - kh + 1
        ow = w_in + 2 * padding - kw + 1
        hp, wp = h + 2 * padding, w_in + 2 * padding

        # Row-tile: multiple of 8 output rows, capped so double-buffered bf16
        # input tiles stay well inside v7x's 64 MiB VMEM even for large Cin.
        rows_cap = max(128, min(block_rows, (4 << 20) // max(1, 2 * cin)))
        toh = max(8, min((rows_cap // wp) // 8 * 8, _round_up(oh, 8)))
        toh = max(toh, _round_up(kh, 8))              # halo must fit in one tile
        n_rt = -(-oh // toh)
        hob = n_rt * toh                              # padded output-row extent
        hp_pad = (n_rt + 1) * toh                     # padded input rows (block r+1 exists)
        bps = hp_pad // toh                           # input row tiles per sample
        rows = toh * wp                               # flat rows per tile

        xp = jnp.pad(x_nhwc.astype(jnp.bfloat16),
                     ((0, 0), (padding, hp_pad - h - padding),
                      (padding, padding), (0, 0)))
        x_flat = xp.reshape(n * hp_pad * wp, cin)

        # (Cout, Cin, KH, KW) -> (KH*KW, Cin, Cpad) bf16 tap weights, VMEM-resident.
        w_taps = jnp.transpose(weight_oikk, (2, 3, 1, 0)).reshape(kh * kw, cin, cout)
        w_taps = jnp.pad(w_taps.astype(jnp.bfloat16), ((0, 0), (0, 0), (0, cpad - cout)))
        offsets = tuple(i * wp + j for i in range(kh) for j in range(kw))

        # Validity mask over the padded (Hob, Wp) output raster.
        mask2d = (jnp.arange(hob) < oh)[:, None] & (jnp.arange(wp) < ow)[None, :]
        mask = jnp.broadcast_to(mask2d[None].astype(jnp.float32), (n, hob, wp))
        mask = mask.reshape(n * hob * wp, 1)

        est = (4 * rows * cin * 2                     # x0 + x1, double-buffered (bf16)
               + 2 * rows * cin * 4                   # f32 halo-concat value
               + 2 * kh * kw * cin * cpad * 2         # resident tap weights
               + 2 * rows * cpad * 2                  # Y output blocks (bf16)
               + 2 * rows * cpad * 4                  # f32 acc + masked temp
               + 8 * cpad * 4 + 4 * rows)
        vmem_a = int(min(max(2 * est, 24 << 20), 40 << 20))

        y2d, psum, pssq = pl.pallas_call(
            functools.partial(_fused_conv_stats_kernel, offsets=offsets, rows=rows),
            out_shape=(jax.ShapeDtypeStruct((n * n_rt * rows, cpad), jnp.bfloat16),
                       jax.ShapeDtypeStruct((n, 1, cpad), jnp.float32),
                       jax.ShapeDtypeStruct((n, 1, cpad), jnp.float32)),
            grid=(n, n_rt),
            in_specs=[
                pl.BlockSpec((rows, cin), lambda b, r: (b * bps + r, 0)),
                pl.BlockSpec((rows, cin), lambda b, r: (b * bps + r + 1, 0)),
                pl.BlockSpec((kh * kw, cin, cpad), lambda b, r: (0, 0, 0)),
                pl.BlockSpec((1, cpad), lambda b, r: (0, 0)),
                pl.BlockSpec((rows, 1), lambda b, r: (b * n_rt + r, 0)),
            ],
            out_specs=(pl.BlockSpec((rows, cpad), lambda b, r: (b * n_rt + r, 0)),
                       pl.BlockSpec((1, 1, cpad), lambda b, r: (b, 0, 0)),
                       pl.BlockSpec((1, 1, cpad), lambda b, r: (b, 0, 0))),
            compiler_params=pltpu.CompilerParams(
                dimension_semantics=("parallel", "arbitrary"),
                vmem_limit_bytes=vmem_a),
        )(x_flat, x_flat, w_taps, c_shift, mask)

        m = n * oh * ow
        scale, shift = _finalize_scale_shift(psum, pssq, c_shift, gamma, beta,
                                             float(m), eps, cout, cpad)
        out2d = _bn_act(y2d, scale, shift, rows, neg_slope, vmem_small)
        out_nhwc = out2d.reshape(n, hob, wp, cpad)[:, :oh, :ow, :cout]
    else:
        # ---------------- stride != 1 fallback: im2col + single matmul ----------------
        patches, oh, ow = _im2col_nhwc(x_nhwc, kh, kw, stride, padding)
        m, kdim = patches.shape
        tm = max(8, min(_round_up(block_rows, 8), _round_up(m, 8)))
        m_pad = _round_up(m, tm)
        nm = m_pad // tm
        patches = jnp.pad(patches.astype(jnp.bfloat16), ((0, m_pad - m), (0, 0)))
        w2d = jnp.transpose(weight_oikk, (2, 3, 1, 0)).reshape(kdim, cout)
        w2d = jnp.pad(w2d.astype(jnp.bfloat16), ((0, 0), (0, cpad - cout)))
        mask = (jnp.arange(m_pad) < m).astype(jnp.float32).reshape(m_pad, 1)

        est = (4 * tm * kdim * 2 + 2 * kdim * cpad * 2 + 2 * tm * cpad * 2
               + 2 * tm * cpad * 4 + 8 * cpad * 4 + 4 * tm)
        vmem_a = int(min(max(2 * est, 24 << 20), 40 << 20))

        y2d, psum, pssq = pl.pallas_call(
            _matmul_stats_kernel,
            out_shape=(jax.ShapeDtypeStruct((m_pad, cpad), jnp.bfloat16),
                       jax.ShapeDtypeStruct((1, cpad), jnp.float32),
                       jax.ShapeDtypeStruct((1, cpad), jnp.float32)),
            grid=(nm,),
            in_specs=[
                pl.BlockSpec((tm, kdim), lambda i: (i, 0)),
                pl.BlockSpec((kdim, cpad), lambda i: (0, 0)),
                pl.BlockSpec((1, cpad), lambda i: (0, 0)),
                pl.BlockSpec((tm, 1), lambda i: (i, 0)),
            ],
            out_specs=(pl.BlockSpec((tm, cpad), lambda i: (i, 0)),
                       pl.BlockSpec((1, cpad), lambda i: (0, 0)),
                       pl.BlockSpec((1, cpad), lambda i: (0, 0))),
            compiler_params=pltpu.CompilerParams(
                dimension_semantics=("arbitrary",),
                vmem_limit_bytes=vmem_a),
        )(patches, w2d, c_shift, mask)

        scale, shift = _finalize_scale_shift(psum, pssq, c_shift, gamma, beta,
                                             float(m), eps, cout, cpad)
        out2d = _bn_act(y2d, scale, shift, tm, neg_slope, vmem_small)
        out_nhwc = out2d[:m].reshape(n, oh, ow, cpad)[..., :cout]

    # Single final layout pass (slice + NHWC->NCHW + f32 cast); fused under jit.
    return jnp.transpose(out_nhwc, (0, 3, 1, 2)).astype(jnp.float32)


# ---------------------------------------------------------------------------
# Pure-JAX reference (sanity check)
# ---------------------------------------------------------------------------
def cna_reference(x_nchw, weight, gamma, beta, *, stride=1, padding=1,
                  eps=1e-5, neg_slope=0.1):
    y = jax.lax.conv_general_dilated(
        x_nchw.astype(jnp.float32), weight.astype(jnp.float32),
        window_strides=(stride, stride),
        padding=((padding, padding), (padding, padding)),
        dimension_numbers=("NCHW", "OIHW", "NCHW"))
    mean = jnp.mean(y, axis=(0, 2, 3), keepdims=True)
    var = jnp.mean((y - mean) ** 2, axis=(0, 2, 3), keepdims=True)
    yh = (y - mean) * jax.lax.rsqrt(var + eps)
    z = yh * gamma.reshape(1, -1, 1, 1) + beta.reshape(1, -1, 1, 1)
    return jnp.where(z >= 0, z, neg_slope * z)


if __name__ == "__main__":
    # CNA(in_channels=4, out_channels=8, kernel_size=3, stride=1) defaults:
    # padding=1, dilation=1, norm='batch' (conv bias=False), LeakyReLU a=0.1.
    N, CIN, H, W = 2, 4, 16, 16
    COUT, KS, STRIDE, PAD = 8, 3, 1, 1
    A = 0.1

    key = jax.random.PRNGKey(0)
    kx, kwt = jax.random.split(key)
    x = jax.random.normal(kx, (N, CIN, H, W), dtype=jnp.float32)

    # Deterministic kaiming-style conv weight (no bias); BN affine: gamma=1, beta=0.
    fan_in = CIN * KS * KS
    gain = (2.0 / (1.0 + A * A)) ** 0.5
    weight = jax.random.normal(kwt, (COUT, CIN, KS, KS), dtype=jnp.float32) * (
        gain / fan_in ** 0.5)
    gamma = jnp.ones((COUT,), dtype=jnp.float32)
    beta = jnp.zeros((COUT,), dtype=jnp.float32)

    # block_rows small so this tiny example runs several row tiles and exercises
    # cross-tile / cross-sample stat accumulation; real layers: 1024-2048.
    fwd = jax.jit(functools.partial(cna_forward, stride=STRIDE, padding=PAD,
                                    eps=1e-5, neg_slope=A, block_rows=160))
    out = jax.block_until_ready(fwd(x, weight, gamma, beta))

    ref = cna_reference(x, weight, gamma, beta, stride=STRIDE, padding=PAD,
                        eps=1e-5, neg_slope=A)
    assert out.shape == (N, COUT, H, W), out.shape
    max_err = float(jnp.max(jnp.abs(out - ref)))
    # bf16 MXU inputs + bf16 Y round-trip -> looser tolerance than pure f32.
    assert jnp.allclose(out, ref, atol=5e-2, rtol=5e-2), max_err

    print("KERNEL_OK")
</pallas_src>

<mosaic_0001>
module attributes {stable_mosaic.version = 11 : i64} {
  func.func @_fused_conv_stats_kernel(%arg0: i32, %arg1: i32, %arg2: memref<144x4xbf16, #tpu.memory_space<vmem>>, %arg3: memref<144x4xbf16, #tpu.memory_space<vmem>>, %arg4: memref<9x4x128xbf16, #tpu.memory_space<vmem>>, %arg5: memref<1x128xf32, #tpu.memory_space<vmem>>, %arg6: memref<144x1xf32, #tpu.memory_space<vmem>>, %arg7: memref<144x128xbf16, #tpu.memory_space<vmem>>, %arg8: memref<1x1x128xf32, #tpu.memory_space<vmem>>, %arg9: memref<1x1x128xf32, #tpu.memory_space<vmem>>) attributes {dimension_semantics = [#tpu.dimension_semantics<parallel>, #tpu.dimension_semantics<arbitrary>], iteration_bounds = array<i64: 2, 2>, scalar_prefetch = 0 : i64, scratch_operands = 0 : i64, tpu.core_type = #tpu.core_type<tc>, window_params = [{transform_indices = @transform_0, window_bounds = array<i64: 144, 4>}, {transform_indices = @transform_1, window_bounds = array<i64: 144, 4>}, {pipeline_mode = #tpu.pipeline_mode<synchronous>, transform_indices = @transform_2, window_bounds = array<i64: 9, 4, 128>}, {pipeline_mode = #tpu.pipeline_mode<synchronous>, transform_indices = @transform_3, window_bounds = array<i64: 1, 128>}, {transform_indices = @transform_4, window_bounds = array<i64: 144, 1>}, {transform_indices = @transform_5, window_bounds = array<i64: 144, 128>}, {transform_indices = @transform_6, window_bounds = array<i64: 1, 1, 128>}, {transform_indices = @transform_7, window_bounds = array<i64: 1, 1, 128>}]} {
    %c0_i32 = arith.constant 0 : i32
    %0 = arith.cmpi eq, %arg1, %c0_i32 : i32
    %1 = arith.extui %0 : i1 to i32
    %c0_i32_0 = arith.constant 0 : i32
    %2 = arith.cmpi ne, %1, %c0_i32_0 : i32
    scf.if %2 {
      %cst_52 = arith.constant 0.000000e+00 : f32
      %84 = vector.broadcast %cst_52 : f32 to vector<1x1x128xf32>
      %c0_53 = arith.constant 0 : index
      %c0_54 = arith.constant 0 : index
      %c0_55 = arith.constant 0 : index
      %85 = vector.load %arg8[%c0_53, %c0_54, %c0_55] : memref<1x1x128xf32, #tpu.memory_space<vmem>>, vector<1x1x128xf32>
      tpu.vector_store %arg8[%c0_53, %c0_54, %c0_55], %84 {strides = array<i32>} : memref<1x1x128xf32, #tpu.memory_space<vmem>>, vector<1x1x128xf32>,
      %cst_56 = arith.constant 0.000000e+00 : f32
      %86 = vector.broadcast %cst_56 : f32 to vector<1x1x128xf32>
      %c0_57 = arith.constant 0 : index
      %c0_58 = arith.constant 0 : index
      %c0_59 = arith.constant 0 : index
      %87 = vector.load %arg9[%c0_57, %c0_58, %c0_59] : memref<1x1x128xf32, #tpu.memory_space<vmem>>, vector<1x1x128xf32>
      tpu.vector_store %arg9[%c0_57, %c0_58, %c0_59], %86 {strides = array<i32>} : memref<1x1x128xf32, #tpu.memory_space<vmem>>, vector<1x1x128xf32>,
    } else {
    }
    %c0 = arith.constant 0 : index
    %c0_1 = arith.constant 0 : index
    %3 = vector.load %arg2[%c0, %c0_1] : memref<144x4xbf16, #tpu.memory_space<vmem>>, vector<144x4xbf16>
    %4 = arith.extf %3 : vector<144x4xbf16> to vector<144x4xf32>
    %c0_2 = arith.constant 0 : index
    %c0_3 = arith.constant 0 : index
    %5 = vector.load %arg3[%c0_2, %c0_3] : memref<144x4xbf16, #tpu.memory_space<vmem>>, vector<144x4xbf16>
    %6 = arith.extf %5 : vector<144x4xbf16> to vector<144x4xf32>
    %7 = tpu.concatenate %4, %6 in 0 : vector<144x4xf32>, vector<144x4xf32> -> vector<288x4xf32>
    %cst = arith.constant 0.000000e+00 : f32
    %8 = vector.broadcast %cst : f32 to vector<144x128xf32>
    %9 = vector.extract_strided_slice %7 {offsets = [0, 0], sizes = [144, 4], strides = [1, 1]} : vector<288x4xf32> to vector<144x4xf32>
    %10 = arith.truncf %9 : vector<144x4xf32> to vector<144x4xbf16>
    %c0_4 = arith.constant 0 : index
    %c0_5 = arith.constant 0 : index
    %c0_6 = arith.constant 0 : index
    %11 = vector.load %arg4[%c0_4, %c0_5, %c0_6] : memref<9x4x128xbf16, #tpu.memory_space<vmem>>, vector<1x4x128xbf16>
    %12 = vector.shape_cast %11 : vector<1x4x128xbf16> to vector<4x128xbf16>
    %cst_7 = arith.constant dense<0.000000e+00> : vector<144x128xf32>
    %13 = tpu.matmul %10, %12, %cst_7 {dimension_numbers = #tpu.dot_dimension_numbers<[1], [0], [0], [1], [0, 0, 1, 1], [], []>} : vector<144x4xbf16>, vector<4x128xbf16>, vector<144x128xf32> -> vector<144x128xf32>
    %14 = arith.addf %8, %13 : vector<144x128xf32>
    %15 = vector.extract_strided_slice %7 {offsets = [1, 0], sizes = [144, 4], strides = [1, 1]} : vector<288x4xf32> to vector<144x4xf32>
    %16 = arith.truncf %15 : vector<144x4xf32> to vector<144x4xbf16>
    %c1 = arith.constant 1 : index
    %c0_8 = arith.constant 0 : index
    %c0_9 = arith.constant 0 : index
    %17 = vector.load %arg4[%c1, %c0_8, %c0_9] : memref<9x4x128xbf16, #tpu.memory_space<vmem>>, vector<1x4x128xbf16>
    %18 = vector.shape_cast %17 : vector<1x4x128xbf16> to vector<4x128xbf16>
    %cst_10 = arith.constant dense<0.000000e+00> : vector<144x128xf32>
    %19 = tpu.matmul %16, %18, %cst_10 {dimension_numbers = #tpu.dot_dimension_numbers<[1], [0], [0], [1], [0, 0, 1, 1], [], []>} : vector<144x4xbf16>, vector<4x128xbf16>, vector<144x128xf32> -> vector<144x128xf32>
    %20 = arith.addf %14, %19 : vector<144x128xf32>
    %21 = vector.extract_strided_slice %7 {offsets = [2, 0], sizes = [144, 4], strides = [1, 1]} : vector<288x4xf32> to vector<144x4xf32>
    %22 = arith.truncf %21 : vector<144x4xf32> to vector<144x4xbf16>
    %c2 = arith.constant 2 : index
    %c0_11 = arith.constant 0 : index
    %c0_12 = arith.constant 0 : index
    %23 = vector.load %arg4[%c2, %c0_11, %c0_12] : memref<9x4x128xbf16, #tpu.memory_space<vmem>>, vector<1x4x128xbf16>
    %24 = vector.shape_cast %23 : vector<1x4x128xbf16> to vector<4x128xbf16>
    %cst_13 = arith.constant dense<0.000000e+00> : vector<144x128xf32>
    %25 = tpu.matmul %22, %24, %cst_13 {dimension_numbers = #tpu.dot_dimension_numbers<[1], [0], [0], [1], [0, 0, 1, 1], [], []>} : vector<144x4xbf16>, vector<4x128xbf16>, vector<144x128xf32> -> vector<144x128xf32>
    %26 = arith.addf %20, %25 : vector<144x128xf32>
    %27 = vector.extract_strided_slice %7 {offsets = [18, 0], sizes = [144, 4], strides = [1, 1]} : vector<288x4xf32> to vector<144x4xf32>
    %28 = arith.truncf %27 : vector<144x4xf32> to vector<144x4xbf16>
    %c3 = arith.constant 3 : index
    %c0_14 = arith.constant 0 : index
    %c0_15 = arith.constant 0 : index
    %29 = vector.load %arg4[%c3, %c0_14, %c0_15] : memref<9x4x128xbf16, #tpu.memory_space<vmem>>, vector<1x4x128xbf16>
    %30 = vector.shape_cast %29 : vector<1x4x128xbf16> to vector<4x128xbf16>
    %cst_16 = arith.constant dense<0.000000e+00> : vector<144x128xf32>
    %31 = tpu.matmul %28, %30, %cst_16 {dimension_numbers = #tpu.dot_dimension_numbers<[1], [0], [0], [1], [0, 0, 1, 1], [], []>} : vector<144x4xbf16>, vector<4x128xbf16>, vector<144x128xf32> -> vector<144x128xf32>
    %32 = arith.addf %26, %31 : vector<144x128xf32>
    %33 = vector.extract_strided_slice %7 {offsets = [19, 0], sizes = [144, 4], strides = [1, 1]} : vector<288x4xf32> to vector<144x4xf32>
    %34 = arith.truncf %33 : vector<144x4xf32> to vector<144x4xbf16>
    %c4 = arith.constant 4 : index
    %c0_17 = arith.constant 0 : index
    %c0_18 = arith.constant 0 : index
    %35 = vector.load %arg4[%c4, %c0_17, %c0_18] : memref<9x4x128xbf16, #tpu.memory_space<vmem>>, vector<1x4x128xbf16>
    %36 = vector.shape_cast %35 : vector<1x4x128xbf16> to vector<4x128xbf16>
    %cst_19 = arith.constant dense<0.000000e+00> : vector<144x128xf32>
    %37 = tpu.matmul %34, %36, %cst_19 {dimension_numbers = #tpu.dot_dimension_numbers<[1], [0], [0], [1], [0, 0, 1, 1], [], []>} : vector<144x4xbf16>, vector<4x128xbf16>, vector<144x128xf32> -> vector<144x128xf32>
    %38 = arith.addf %32, %37 : vector<144x128xf32>
    %39 = vector.extract_strided_slice %7 {offsets = [20, 0], sizes = [144, 4], strides = [1, 1]} : vector<288x4xf32> to vector<144x4xf32>
    %40 = arith.truncf %39 : vector<144x4xf32> to vector<144x4xbf16>
    %c5 = arith.constant 5 : index
    %c0_20 = arith.constant 0 : index
    %c0_21 = arith.constant 0 : index
    %41 = vector.load %arg4[%c5, %c0_20, %c0_21] : memref<9x4x128xbf16, #tpu.memory_space<vmem>>, vector<1x4x128xbf16>
    %42 = vector.shape_cast %41 : vector<1x4x128xbf16> to vector<4x128xbf16>
    %cst_22 = arith.constant dense<0.000000e+00> : vector<144x128xf32>
    %43 = tpu.matmul %40, %42, %cst_22 {dimension_numbers = #tpu.dot_dimension_numbers<[1], [0], [0], [1], [0, 0, 1, 1], [], []>} : vector<144x4xbf16>, vector<4x128xbf16>, vector<144x128xf32> -> vector<144x128xf32>
    %44 = arith.addf %38, %43 : vector<144x128xf32>
    %45 = vector.extract_strided_slice %7 {offsets = [36, 0], sizes = [144, 4], strides = [1, 1]} : vector<288x4xf32> to vector<144x4xf32>
    %46 = arith.truncf %45 : vector<144x4xf32> to vector<144x4xbf16>
    %c6 = arith.constant 6 : index
    %c0_23 = arith.constant 0 : index
    %c0_24 = arith.constant 0 : index
    %47 = vector.load %arg4[%c6, %c0_23, %c0_24] : memref<9x4x128xbf16, #tpu.memory_space<vmem>>, vector<1x4x128xbf16>
    %48 = vector.shape_cast %47 : vector<1x4x128xbf16> to vector<4x128xbf16>
    %cst_25 = arith.constant dense<0.000000e+00> : vector<144x128xf32>
    %49 = tpu.matmul %46, %48, %cst_25 {dimension_numbers = #tpu.dot_dimension_numbers<[1], [0], [0], [1], [0, 0, 1, 1], [], []>} : vector<144x4xbf16>, vector<4x128xbf16>, vector<144x128xf32> -> vector<144x128xf32>
    %50 = arith.addf %44, %49 : vector<144x128xf32>
    %51 = vector.extract_strided_slice %7 {offsets = [37, 0], sizes = [144, 4], strides = [1, 1]} : vector<288x4xf32> to vector<144x4xf32>
    %52 = arith.truncf %51 : vector<144x4xf32> to vector<144x4xbf16>
    %c7 = arith.constant 7 : index
    %c0_26 = arith.constant 0 : index
    %c0_27 = arith.constant 0 : index
    %53 = vector.load %arg4[%c7, %c0_26, %c0_27] : memref<9x4x128xbf16, #tpu.memory_space<vmem>>, vector<1x4x128xbf16>
    %54 = vector.shape_cast %53 : vector<1x4x128xbf16> to vector<4x128xbf16>
    %cst_28 = arith.constant dense<0.000000e+00> : vector<144x128xf32>
    %55 = tpu.matmul %52, %54, %cst_28 {dimension_numbers = #tpu.dot_dimension_numbers<[1], [0], [0], [1], [0, 0, 1, 1], [], []>} : vector<144x4xbf16>, vector<4x128xbf16>, vector<144x128xf32> -> vector<144x128xf32>
    %56 = arith.addf %50, %55 : vector<144x128xf32>
    %57 = vector.extract_strided_slice %7 {offsets = [38, 0], sizes = [144, 4], strides = [1, 1]} : vector<288x4xf32> to vector<144x4xf32>
    %58 = arith.truncf %57 : vector<144x4xf32> to vector<144x4xbf16>
    %c8 = arith.constant 8 : index
    %c0_29 = arith.constant 0 : index
    %c0_30 = arith.constant 0 : index
    %59 = vector.load %arg4[%c8, %c0_29, %c0_30] : memref<9x4x128xbf16, #tpu.memory_space<vmem>>, vector<1x4x128xbf16>
    %60 = vector.shape_cast %59 : vector<1x4x128xbf16> to vector<4x128xbf16>
    %cst_31 = arith.constant dense<0.000000e+00> : vector<144x128xf32>
    %61 = tpu.matmul %58, %60, %cst_31 {dimension_numbers = #tpu.dot_dimension_numbers<[1], [0], [0], [1], [0, 0, 1, 1], [], []>} : vector<144x4xbf16>, vector<4x128xbf16>, vector<144x128xf32> -> vector<144x128xf32>
    %62 = arith.addf %56, %61 : vector<144x128xf32>
    %63 = arith.truncf %62 : vector<144x128xf32> to vector<144x128xbf16>
    %c0_32 = arith.constant 0 : index
    %c0_33 = arith.constant 0 : index
    %64 = vector.load %arg7[%c0_32, %c0_33] : memref<144x128xbf16, #tpu.memory_space<vmem>>, vector<144x128xbf16>
    tpu.vector_store %arg7[%c0_32, %c0_33], %63 {strides = array<i32>} : memref<144x128xbf16, #tpu.memory_space<vmem>>, vector<144x128xbf16>,
    %c0_34 = arith.constant 0 : index
    %c0_35 = arith.constant 0 : index
    %65 = vector.load %arg5[%c0_34, %c0_35] : memref<1x128xf32, #tpu.memory_space<vmem>>, vector<1x128xf32>
    %66 = vector.broadcast %65 : vector<1x128xf32> to vector<144x128xf32>
    %67 = arith.subf %62, %66 : vector<144x128xf32>
    %c0_36 = arith.constant 0 : index
    %c0_37 = arith.constant 0 : index
    %68 = vector.load %arg6[%c0_36, %c0_37] : memref<144x1xf32, #tpu.memory_space<vmem>>, vector<144x1xf32>
    %69 = vector.broadcast %68 : vector<144x1xf32> to vector<144x128xf32>
    %70 = arith.mulf %67, %69 : vector<144x128xf32>
    %c0_38 = arith.constant 0 : index
    %c0_39 = arith.constant 0 : index
    %c0_40 = arith.constant 0 : index
    %71 = vector.load %arg8[%c0_38, %c0_39, %c0_40] : memref<1x1x128xf32, #tpu.memory_space<vmem>>, vector<1x1x128xf32>
    %cst_41 = arith.constant dense<0.000000e+00> : vector<128xf32>
    %72 = vector.multi_reduction <add>, %70, %cst_41 [0] : vector<144x128xf32> to vector<128xf32>
    %73 = vector.shape_cast %72 : vector<128xf32> to vector<1x128xf32>
    %74 = vector.shape_cast %73 : vector<1x128xf32> to vector<1x1x128xf32>
    %75 = arith.addf %71, %74 : vector<1x1x128xf32>
    %c0_42 = arith.constant 0 : index
    %c0_43 = arith.constant 0 : index
    %c0_44 = arith.constant 0 : index
    %76 = vector.load %arg8[%c0_42, %c0_43, %c0_44] : memref<1x1x128xf32, #tpu.memory_space<vmem>>, vector<1x1x128xf32>
    tpu.vector_store %arg8[%c0_42, %c0_43, %c0_44], %75 {strides = array<i32>} : memref<1x1x128xf32, #tpu.memory_space<vmem>>, vector<1x1x128xf32>,
    %c0_45 = arith.constant 0 : index
    %c0_46 = arith.constant 0 : index
    %c0_47 = arith.constant 0 : index
    %77 = vector.load %arg9[%c0_45, %c0_46, %c0_47] : memref<1x1x128xf32, #tpu.memory_space<vmem>>, vector<1x1x128xf32>
    %78 = arith.mulf %70, %70 : vector<144x128xf32>
    %cst_48 = arith.constant dense<0.000000e+00> : vector<128xf32>
    %79 = vector.multi_reduction <add>, %78, %cst_48 [0] : vector<144x128xf32> to vector<128xf32>
    %80 = vector.shape_cast %79 : vector<128xf32> to vector<1x128xf32>
    %81 = vector.shape_cast %80 : vector<1x128xf32> to vector<1x1x128xf32>
    %82 = arith.addf %77, %81 : vector<1x1x128xf32>
    %c0_49 = arith.constant 0 : index
    %c0_50 = arith.constant 0 : index
    %c0_51 = arith.constant 0 : index
    %83 = vector.load %arg9[%c0_49, %c0_50, %c0_51] : memref<1x1x128xf32, #tpu.memory_space<vmem>>, vector<1x1x128xf32>
    tpu.vector_store %arg9[%c0_49, %c0_50, %c0_51], %82 {strides = array<i32>} : memref<1x1x128xf32, #tpu.memory_space<vmem>>, vector<1x1x128xf32>,
    return
  }
  func.func @transform_0(%arg0: i32, %arg1: i32) -> (i32, i32) {
    %c3_i32 = arith.constant 3 : i32
    %0 = arith.muli %arg0, %c3_i32 : i32
    %1 = arith.addi %0, %arg1 : i32
    %c0_i32 = arith.constant 0 : i32
    %c0_i32_0 = arith.constant 0 : i32
    return %1, %c0_i32 : i32, i32
  }
  func.func @transform_1(%arg0: i32, %arg1: i32) -> (i32, i32) {
    %c3_i32 = arith.constant 3 : i32
    %0 = arith.muli %arg0, %c3_i32 : i32
    %1 = arith.addi %0, %arg1 : i32
    %c1_i32 = arith.constant 1 : i32
    %2 = arith.addi %1, %c1_i32 : i32
    %c0_i32 = arith.constant 0 : i32
    %c0_i32_0 = arith.constant 0 : i32
    return %2, %c0_i32 : i32, i32
  }
  func.func @transform_2(%arg0: i32, %arg1: i32) -> (i32, i32, i32) {
    %c0_i32 = arith.constant 0 : i32
    %c0_i32_0 = arith.constant 0 : i32
    %c0_i32_1 = arith.constant 0 : i32
    %c0_i32_2 = arith.constant 0 : i32
    return %c0_i32, %c0_i32_0, %c0_i32_1 : i32, i32, i32
  }
  func.func @transform_3(%arg0: i32, %arg1: i32) -> (i32, i32) {
    %c0_i32 = arith.constant 0 : i32
    %c0_i32_0 = arith.constant 0 : i32
    %c0_i32_1 = arith.constant 0 : i32
    return %c0_i32, %c0_i32_0 : i32, i32
  }
  func.func @transform_4(%arg0: i32, %arg1: i32) -> (i32, i32) {
    %c2_i32 = arith.constant 2 : i32
    %0 = arith.muli %arg0, %c2_i32 : i32
    %1 = arith.addi %0, %arg1 : i32
    %c0_i32 = arith.constant 0 : i32
    %c0_i32_0 = arith.constant 0 : i32
    return %1, %c0_i32 : i32, i32
  }
  func.func @transform_5(%arg0: i32, %arg1: i32) -> (i32, i32) {
    %c2_i32 = arith.constant 2 : i32
    %0 = arith.muli %arg0, %c2_i32 : i32
    %1 = arith.addi %0, %arg1 : i32
    %c0_i32 = arith.constant 0 : i32
    %c0_i32_0 = arith.constant 0 : i32
    return %1, %c0_i32 : i32, i32
  }
  func.func @transform_6(%arg0: i32, %arg1: i32) -> (i32, i32, i32) {
    %c0_i32 = arith.constant 0 : i32
    %c0_i32_0 = arith.constant 0 : i32
    %c0_i32_1 = arith.constant 0 : i32
    return %arg0, %c0_i32, %c0_i32_0 : i32, i32, i32
  }
  func.func @transform_7(%arg0: i32, %arg1: i32) -> (i32, i32, i32) {
    %c0_i32 = arith.constant 0 : i32
    %c0_i32_0 = arith.constant 0 : i32
    %c0_i32_1 = arith.constant 0 : i32
    return %arg0, %c0_i32, %c0_i32_0 : i32, i32, i32
  }
}

module attributes {stable_mosaic.version = 11 : i64} {
  func.func @_bn_act_kernel(%arg0: i32, %arg1: memref<144x128xbf16, #tpu.memory_space<vmem>>, %arg2: memref<1x128xf32, #tpu.memory_space<vmem>>, %arg3: memref<1x128xf32, #tpu.memory_space<vmem>>, %arg4: memref<144x128xbf16, #tpu.memory_space<vmem>>) attributes {dimension_semantics = [#tpu.dimension_semantics<parallel>], iteration_bounds = array<i64: 4>, scalar_prefetch = 0 : i64, scratch_operands = 0 : i64, tpu.core_type = #tpu.core_type<tc>, window_params = [{transform_indices = @transform_0, window_bounds = array<i64: 144, 128>}, {pipeline_mode = #tpu.pipeline_mode<synchronous>, transform_indices = @transform_1, window_bounds = array<i64: 1, 128>}, {pipeline_mode = #tpu.pipeline_mode<synchronous>, transform_indices = @transform_2, window_bounds = array<i64: 1, 128>}, {transform_indices = @transform_3, window_bounds = array<i64: 144, 128>}]} {
    %c0 = arith.constant 0 : index
    %c0_0 = arith.constant 0 : index
    %0 = vector.load %arg1[%c0, %c0_0] : memref<144x128xbf16, #tpu.memory_space<vmem>>, vector<144x128xbf16>
    %1 = arith.extf %0 : vector<144x128xbf16> to vector<144x128xf32>
    %c0_1 = arith.constant 0 : index
    %c0_2 = arith.constant 0 : index
    %2 = vector.load %arg2[%c0_1, %c0_2] : memref<1x128xf32, #tpu.memory_space<vmem>>, vector<1x128xf32>
    %3 = vector.broadcast %2 : vector<1x128xf32> to vector<144x128xf32>
    %4 = arith.mulf %1, %3 : vector<144x128xf32>
    %c0_3 = arith.constant 0 : index
    %c0_4 = arith.constant 0 : index
    %5 = vector.load %arg3[%c0_3, %c0_4] : memref<1x128xf32, #tpu.memory_space<vmem>>, vector<1x128xf32>
    %6 = vector.broadcast %5 : vector<1x128xf32> to vector<144x128xf32>
    %7 = arith.addf %4, %6 : vector<144x128xf32>
    %cst = arith.constant 1.000000e-01 : f32
    %8 = vector.broadcast %cst : f32 to vector<144x128xf32>
    %9 = arith.mulf %8, %7 : vector<144x128xf32>
    %10 = arith.maximumf %7, %9 : vector<144x128xf32>
    %11 = arith.truncf %10 : vector<144x128xf32> to vector<144x128xbf16>
    %c0_5 = arith.constant 0 : index
    %c0_6 = arith.constant 0 : index
    %12 = vector.load %arg4[%c0_5, %c0_6] : memref<144x128xbf16, #tpu.memory_space<vmem>>, vector<144x128xbf16>
    tpu.vector_store %arg4[%c0_5, %c0_6], %11 {strides = array<i32>} : memref<144x128xbf16, #tpu.memory_space<vmem>>, vector<144x128xbf16>,
    return
  }
  func.func @transform_0(%arg0: i32) -> (i32, i32) {
    %c0_i32 = arith.constant 0 : i32
    %c0_i32_0 = arith.constant 0 : i32
    return %arg0, %c0_i32 : i32, i32
  }
  func.func @transform_1(%arg0: i32) -> (i32, i32) {
    %c0_i32 = arith.constant 0 : i32
    %c0_i32_0 = arith.constant 0 : i32
    %c0_i32_1 = arith.constant 0 : i32
    return %c0_i32, %c0_i32_0 : i32, i32
  }
  func.func @transform_2(%arg0: i32) -> (i32, i32) {
    %c0_i32 = arith.constant 0 : i32
    %c0_i32_0 = arith.constant 0 : i32
    %c0_i32_1 = arith.constant 0 : i32
    return %c0_i32, %c0_i32_0 : i32, i32
  }
  func.func @transform_3(%arg0: i32) -> (i32, i32) {
    %c0_i32 = arith.constant 0 : i32
    %c0_i32_0 = arith.constant 0 : i32
    return %arg0, %c0_i32 : i32, i32
  }
}

</mosaic_0001>

<llo_original>
// kernel: cna_forward.3
$region0: #{cna_forward.3}
  #allocation0 [shape = 'u32[]', space=smem, size = 0x4, offset = 0x4, fixed_abs, tag = 'smem constant byte address 0x4 - core index']
  #allocation1 [shape = 'u32[144,128]{1,0:T(1,128)}', space=vmem, size = 0x12000, scoped, tag = 'internal scratch']
  %s0 = inlined_call_operand.vmem [shape: bf16[576,128], index: 0, kind: input, shape index: {}]
  %s1 = inlined_call_operand.vmem [shape: f32[1,128], index: 1, kind: input, shape index: {}]
  %s2 = inlined_call_operand.vmem [shape: f32[1,128], index: 2, kind: input, shape index: {}]
  %s3 = inlined_call_operand.vmem [shape: bf16[576,128], index: 3, kind: output, shape index: {}]
  %s4 = sld [smem:[#allocation0]]
  $region45: #{cna_forward.3} parent=0
    _
  %s6 = ssub.s32 1, %s4
  %s7 = scalar_select 0, %s6, %s4
  loop: start=0, step=1, limit=6
  $region2: #{cna_forward.3} parent=0 // loop_pre_header
    _
  $region3: #{cna_forward.3} parent=0 // loop_header
    %s9 = sphi 0, %s13
    %p10 = scmp.ge.s32.totalorder %s9, 6
    %s19 = sphi 0, %s21
    %s22 = sphi 0, %s19
    %s23 = sphi 0, %s22
    %s39 = sphi 0, %s23
    %s43 = sphi 0, %s43
    %s45 = sphi 0, %s43
    %s46 = sphi 0, %s45
    %s60 = sphi 0, %s46
    %s64 = sphi 0, %s64
    %s66 = sphi 0, %s64
    %s67 = sphi 0, %s66
    %s81 = sphi 0, %s67
    %s87 = sphi 0, %s89
    %s90 = sphi 0, %s87
    %s91 = sphi 0, %s90
    %s107 = sphi 0, %s91
  $region4: #{cna_forward.3} parent=0 // loop_header_branch
    %12 = sbr.rel (%p10) target = $region8
  $region5: #{cna_forward.3} parent=0 // loop_body
    %s14 = ssub.s32 %s9, 1
    %s15 = ssub.s32 %s9, 2
    %s16 = sadd.s32 %s9, 1
    %s17 = ssub.s32 %s9, %s16
    %p18 = scmp.eq.s32.totalorder %s17, 0
    %s20 = sadd.s32 %s19, 1
    %s21 = scalar_select %p18, %s19, %s20
    %p24 = pneg %p18
    %p25 = scmp.eq.s32.totalorder %s9, 3
    %p26 = por %p24, %p25
    %p27 = scmp.ne.s32.totalorder %s19, %s22
    %p28 = scmp.eq.s32.totalorder %s9, 0
    %p29 = por %p27, %p28
    %p30 = scmp.ne.s32.totalorder %s19, %s22
    %p31 = scmp.eq.s32.totalorder %s14, 3
    %p32 = por %p30, %p31
    %p33 = scmp.ne.s32.totalorder %s22, %s23
    %p34 = scmp.eq.s32.totalorder %s14, 0
    %p35 = por %p33, %p34
    %p36 = scmp.ne.s32.totalorder %s22, %s23
    %p37 = scmp.eq.s32.totalorder %s15, 3
    %p38 = por %p36, %p37
    %p40 = scmp.ne.s32.totalorder %s23, %s39
    %p41 = scmp.eq.s32.totalorder %s15, 0
    %p42 = por %p40, %p41
    %s44 = sadd.s32 %s43, 1
    %p47 = scmp.eq.s32.totalorder %s9, 3
    %p48 = scmp.ne.s32.totalorder %s43, %s45
    %p49 = scmp.eq.s32.totalorder %s9, 0
    %p50 = por %p48, %p49
    %p51 = scmp.ne.s32.totalorder %s43, %s45
    %p52 = scmp.eq.s32.totalorder %s14, 3
    %p53 = por %p51, %p52
    %p54 = scmp.ne.s32.totalorder %s45, %s46
    %p55 = scmp.eq.s32.totalorder %s14, 0
    %p56 = por %p54, %p55
    %p57 = scmp.ne.s32.totalorder %s45, %s46
    %p58 = scmp.eq.s32.totalorder %s15, 3
    %p59 = por %p57, %p58
    %p61 = scmp.ne.s32.totalorder %s46, %s60
    %p62 = scmp.eq.s32.totalorder %s15, 0
    %p63 = por %p61, %p62
    %s65 = sadd.s32 %s64, 1
    %p68 = scmp.eq.s32.totalorder %s9, 3
    %p69 = scmp.ne.s32.totalorder %s64, %s66
    %p70 = scmp.eq.s32.totalorder %s9, 0
    %p71 = por %p69, %p70
    %p72 = scmp.ne.s32.totalorder %s64, %s66
    %p73 = scmp.eq.s32.totalorder %s14, 3
    %p74 = por %p72, %p73
    %p75 = scmp.ne.s32.totalorder %s66, %s67
    %p76 = scmp.eq.s32.totalorder %s14, 0
    %p77 = por %p75, %p76
    %p78 = scmp.ne.s32.totalorder %s66, %s67
    %p79 = scmp.eq.s32.totalorder %s15, 3
    %p80 = por %p78, %p79
    %p82 = scmp.ne.s32.totalorder %s67, %s81
    %p83 = scmp.eq.s32.totalorder %s15, 0
    %p84 = por %p82, %p83
    %s85 = ssub.s32 %s9, %s16
    %p86 = scmp.eq.s32.totalorder %s85, 0
    %s88 = sadd.s32 %s87, 1
    %s89 = scalar_select %p86, %s87, %s88
    %p92 = pneg %p86
    %p93 = scmp.eq.s32.totalorder %s9, 3
    %p94 = por %p92, %p93
    %p95 = scmp.ne.s32.totalorder %s87, %s90
    %p96 = scmp.eq.s32.totalorder %s9, 0
    %p97 = por %p95, %p96
    %p98 = scmp.ne.s32.totalorder %s87, %s90
    %p99 = scmp.eq.s32.totalorder %s14, 3
    %p100 = por %p98, %p99
    %p101 = scmp.ne.s32.totalorder %s90, %s91
    %p102 = scmp.eq.s32.totalorder %s14, 0
    %p103 = por %p101, %p102
    %p104 = scmp.ne.s32.totalorder %s90, %s91
    %p105 = scmp.eq.s32.totalorder %s15, 3
    %p106 = por %p104, %p105
    %p108 = scmp.ne.s32.totalorder %s91, %s107
    %p109 = scmp.eq.s32.totalorder %s15, 0
    %p110 = por %p108, %p109
    %p111 = scmp.le.s32.totalorder 1, %s9
    %p112 = scmp.lt.s32.totalorder %s9, 5
    %p113 = pnand %p111, %p112
    %p114 = pneg %p113
    // Predicated region
    $region9: #{cna_forward.3} parent=5 // pred_check
      _
    $region10: #{cna_forward.3} parent=5 // pred_check_branch
      %116 = sbr.rel (%p113) target = $region12
    $region11: #{cna_forward.3} parent=5 // pred_region
      %s117 = ssub.s32 %s9, 1
      // Predicated region
      $region13: #{cna_forward.3} parent=11 // pred_check
        %p118 = pneg %p56
      $region14: #{cna_forward.3} parent=11 // pred_check_branch
        %120 = sbr.rel (%p118) target = $region16
      $region15: #{cna_forward.3} parent=11 // pred_region
        _
      $region16: #{cna_forward.3} parent=11 // pred_fallthru
        _
      // Predicated region
      $region17: #{cna_forward.3} parent=11 // pred_check
        %p121 = pneg %p77
      $region18: #{cna_forward.3} parent=11 // pred_check_branch
        %123 = sbr.rel (%p121) target = $region20
      $region19: #{cna_forward.3} parent=11 // pred_region
        _
      $region20: #{cna_forward.3} parent=11 // pred_fallthru
        _
    $region12: #{cna_forward.3} parent=5 // pred_fallthru
      _
    %p124 = scmp.lt.s32.totalorder %s9, 4
    // Predicated region
    $region21: #{cna_forward.3} parent=5 // pred_check
      %p125 = pneg %p124
    $region22: #{cna_forward.3} parent=5 // pred_check_branch
      %127 = sbr.rel (%p125) target = $region24
    $region23: #{cna_forward.3} parent=5 // pred_region
      // Predicated region
      $region25: #{cna_forward.3} parent=23 // pred_check
        %p128 = pneg %p29
      $region26: #{cna_forward.3} parent=23 // pred_check_branch
        %130 = sbr.rel (%p128) target = $region28
      $region27: #{cna_forward.3} parent=23 // pred_region
        %s131 = smul.u32 18, %s9
        %p132 = scmp.lt.s32.totalorder %s131, 71
        %s133 = scalar_select %p132, %s131, 71
        %s134 = smul.addr %s133, 4
        %s135 = scalar_lea.vmem %s0, %s134
        %s136 = smul.u32 18, %s9
      $region28: #{cna_forward.3} parent=23 // pred_fallthru
        _
    $region24: #{cna_forward.3} parent=5 // pred_fallthru
      _
    %p137 = scmp.le.s32.totalorder 1, %s9
    %p138 = scmp.lt.s32.totalorder %s9, 5
    %p139 = pnand %p137, %p138
    %p140 = pneg %p139
    // Predicated region
    $region29: #{cna_forward.3} parent=5 // pred_check
      _
    $region30: #{cna_forward.3} parent=5 // pred_check_branch
      %142 = sbr.rel (%p139) target = $region32
    $region31: #{cna_forward.3} parent=5 // pred_region
      %s143 = ssub.s32 %s9, 1
      %s144 = smul.u32 18, %s14
      %p145 = scmp.lt.s32.totalorder %s144, 71
      %s146 = scalar_select %p145, %s144, 71
      %s147 = smul.addr %s146, 4
      %s148 = scalar_lea.vmem %s0, %s147
      %p149 = pneg %p35
      %p150 = pneg %p32
      %p151 = pneg %p56
      %p152 = pneg %p53
      %p153 = pneg %p77
      %p154 = pneg %p74
      %p155 = pneg %p103
      %p156 = pneg %p100
      %s157 = smul.u32 18, %s14
      %p158 = scmp.lt.s32.totalorder %s157, 71
      %s159 = scalar_select %p158, %s157, 71
      %s160 = smul.addr %s159, 4
      %s161 = scalar_lea.vmem %s3, %s160
      %s162 = smul.u32 18, %s14
      %p163 = scmp.lt.s32.totalorder %s162, 71
      %s164 = scalar_select %p163, %s162, 71
      %s165 = smul.addr %s164, 4
      %s166 = scalar_lea.vmem %s0, %s165
      %s167 = smul.u32 18, %s14
      %s168 = smul.u32 18, %s14
      %p169 = scmp.lt.s32.totalorder %s168, 71
      %s170 = scalar_select %p169, %s168, 71
      %s171 = smul.addr %s170, 4
      %s172 = scalar_lea.vmem %s3, %s171
      %s173 = smul.u32 18, %s14
      %v174 = vld [vmem:[%s166] sm:$0xf]
      %v175 = vld [vmem:[%s166 + $0x4] sm:$0xf]
      %v176 = vld [vmem:[%s166 + $0x8] sm:$0xf]
      %v177 = vld [vmem:[%s166 + $0xc] sm:$0xf]
      %v178 = vld [vmem:[%s166 + $0x10] sm:$0xf]
      %v179 = vld [vmem:[%s166 + $0x14] sm:$0xf]
      %v180 = vld [vmem:[%s166 + $0x18] sm:$0xf]
      %v181 = vld [vmem:[%s166 + $0x1c] sm:$0xf]
      %v182 = vld [vmem:[%s166 + $0x20] sm:$0xf]
      %v183 = vld [vmem:[%s166 + $0x24] sm:$0xf]
      %v184 = vld [vmem:[%s166 + $0x28] sm:$0xf]
      %v185 = vld [vmem:[%s166 + $0x2c] sm:$0xf]
      %v186 = vld [vmem:[%s166 + $0x30] sm:$0xf]
      %v187 = vld [vmem:[%s166 + $0x34] sm:$0xf]
      %v188 = vld [vmem:[%s166 + $0x38] sm:$0xf]
      %v189 = vld [vmem:[%s166 + $0x3c] sm:$0xf]
      %v190 = vld [vmem:[%s166 + $0x40] sm:$0xf]
      %v191 = vld [vmem:[%s166 + $0x44] sm:$0xf]
      %v192 = vunpack.c.l.bf16 %v174
      %v193 = vunpack.c.l.bf16 %v175
      %v194 = vunpack.c.l.bf16 %v176
      %v195 = vunpack.c.l.bf16 %v177
      %v196 = vunpack.c.l.bf16 %v178
      %v197 = vunpack.c.l.bf16 %v179
      %v198 = vunpack.c.l.bf16 %v180
      %v199 = vunpack.c.l.bf16 %v181
      %v200 = vunpack.c.l.bf16 %v182
      %v201 = vunpack.c.l.bf16 %v183
      %v202 = vunpack.c.l.bf16 %v184
      %v203 = vunpack.c.l.bf16 %v185
      %v204 = vunpack.c.l.bf16 %v186
      %v205 = vunpack.c.l.bf16 %v187
      %v206 = vunpack.c.l.bf16 %v188
      %v207 = vunpack.c.l.bf16 %v189
      %v208 = vunpack.c.l.bf16 %v190
      %v209 = vunpack.c.l.bf16 %v191
      %v210 = vld [vmem:[%s1] sm:$0x1]
      %v212 = vlaneseq
      %v213 = vshrl.u32 %v212, 7
      %v214 = vsub.s32 0, %v213
      %v215 = vrot.slane %v210, %v214
      %v217 = vmul.f32 %v192, %v215
      %v218 = vmul.f32 %v193, %v215
      %v219 = vmul.f32 %v194, %v215
      %v220 = vmul.f32 %v195, %v215
      %v221 = vmul.f32 %v196, %v215
      %v222 = vmul.f32 %v197, %v215
      %v223 = vmul.f32 %v198, %v215
      %v224 = vmul.f32 %v199, %v215
      %v225 = vmul.f32 %v200, %v215
      %v226 = vmul.f32 %v201, %v215
      %v227 = vmul.f32 %v202, %v215
      %v228 = vmul.f32 %v203, %v215
      %v229 = vmul.f32 %v204, %v215
      %v230 = vmul.f32 %v205, %v215
      %v231 = vmul.f32 %v206, %v215
      %v232 = vmul.f32 %v207, %v215
      %v233 = vmul.f32 %v208, %v215
      %v234 = vmul.f32 %v209, %v215
      %v235 = vld [vmem:[%s2] sm:$0x1]
      %v237 = vlaneseq
      %v238 = vshrl.u32 %v237, 7
      %v239 = vsub.s32 0, %v238
      %v240 = vrot.slane %v235, %v239
      %v242 = vadd.f32 %v217, %v240
      %v243 = vadd.f32 %v218, %v240
      %v244 = vadd.f32 %v219, %v240
      %v245 = vadd.f32 %v220, %v240
      %v246 = vadd.f32 %v221, %v240
      %v247 = vadd.f32 %v222, %v240
      %v248 = vadd.f32 %v223, %v240
      %v249 = vadd.f32 %v224, %v240
      %v250 = vadd.f32 %v225, %v240
      %v251 = vadd.f32 %v226, %v240
      %v252 = vadd.f32 %v227, %v240
      %v253 = vadd.f32 %v228, %v240
      %v254 = vadd.f32 %v229, %v240
      %v255 = vadd.f32 %v230, %v240
      %v256 = vadd.f32 %v231, %v240
      %v257 = vadd.f32 %v232, %v240
      %v258 = vadd.f32 %v233, %v240
      %v259 = vadd.f32 %v234, %v240
      %v260 = vmul.f32 %v242, 0.1
      %v261 = vmul.f32 %v243, 0.1
      %v262 = vmul.f32 %v244, 0.1
      %v263 = vmul.f32 %v245, 0.1
      %v264 = vmul.f32 %v246, 0.1
      %v265 = vmul.f32 %v247, 0.1
      %v266 = vmul.f32 %v248, 0.1
      %v267 = vmul.f32 %v249, 0.1
      %v268 = vmul.f32 %v250, 0.1
      %v269 = vmul.f32 %v251, 0.1
      %v270 = vmul.f32 %v252, 0.1
      %v271 = vmul.f32 %v253, 0.1
      %v272 = vmul.f32 %v254, 0.1
      %v273 = vmul.f32 %v255, 0.1
      %v274 = vmul.f32 %v256, 0.1
      %v275 = vmul.f32 %v257, 0.1
      %v276 = vmul.f32 %v258, 0.1
      %v277 = vmul.f32 %v259, 0.1
      %v278 = vmax.f32 %v242, %v260
      %v279 = vmax.f32 %v243, %v261
      %v280 = vmax.f32 %v244, %v262
      %v281 = vmax.f32 %v245, %v263
      %v282 = vmax.f32 %v246, %v264
      %v283 = vmax.f32 %v247, %v265
      %v284 = vmax.f32 %v248, %v266
      %v285 = vmax.f32 %v249, %v267
      %v286 = vmax.f32 %v250, %v268
      %v287 = vmax.f32 %v251, %v269
      %v288 = vmax.f32 %v252, %v270
      %v289 = vmax.f32 %v253, %v271
      %v290 = vmax.f32 %v254, %v272
      %v291 = vmax.f32 %v255, %v273
      %v292 = vmax.f32 %v256, %v274
      %v293 = vmax.f32 %v257, %v275
      %v294 = vmax.f32 %v258, %v276
      %v295 = vmax.f32 %v259, %v277
      %v296 = vpack.c.bf16 %v279, %v278
      %v297 = vpack.c.bf16 %v281, %v280
      %v298 = vpack.c.bf16 %v283, %v282
      %v299 = vpack.c.bf16 %v285, %v284
      %v300 = vpack.c.bf16 %v287, %v286
      %v301 = vpack.c.bf16 %v289, %v288
      %v302 = vpack.c.bf16 %v291, %v290
      %v303 = vpack.c.bf16 %v293, %v292
      %v304 = vpack.c.bf16 %v295, %v294
      %v314 = vunpack.c.l.b16 %v296
      %v315 = vunpack.c.h.b16 %v296
      %v316 = vunpack.c.l.b16 %v297
      %v317 = vunpack.c.h.b16 %v297
      %v318 = vunpack.c.l.b16 %v298
      %v319 = vunpack.c.h.b16 %v298
      %v320 = vunpack.c.l.b16 %v299
      %v321 = vunpack.c.h.b16 %v299
      %v322 = vunpack.c.l.b16 %v300
      %v323 = vunpack.c.h.b16 %v300
      %v324 = vunpack.c.l.b16 %v301
      %v325 = vunpack.c.h.b16 %v301
      %v326 = vunpack.c.l.b16 %v302
      %v327 = vunpack.c.h.b16 %v302
      %v328 = vunpack.c.l.b16 %v303
      %v329 = vunpack.c.h.b16 %v303
      %v330 = vunpack.c.l.b16 %v304
      %v331 = vunpack.c.h.b16 %v304
      %v332 = vpack.c.b16 %v314, %v314
      %v333 = vpack.c.b16 %v315, %v315
      %v334 = vpack.c.b16 %v316, %v316
      %v335 = vpack.c.b16 %v317, %v317
      %v336 = vpack.c.b16 %v318, %v318
      %v337 = vpack.c.b16 %v319, %v319
      %v338 = vpack.c.b16 %v320, %v320
      %v339 = vpack.c.b16 %v321, %v321
      %v340 = vpack.c.b16 %v322, %v322
      %v341 = vpack.c.b16 %v323, %v323
      %v342 = vpack.c.b16 %v324, %v324
      %v343 = vpack.c.b16 %v325, %v325
      %v344 = vpack.c.b16 %v326, %v326
      %v345 = vpack.c.b16 %v327, %v327
      %v346 = vpack.c.b16 %v328, %v328
      %v347 = vpack.c.b16 %v329, %v329
      %v348 = vpack.c.b16 %v330, %v330
      %v349 = vpack.c.b16 %v331, %v331
      %368 = vst [vmem:[%s172] sm:$0xf] %v332
      %369 = vst [vmem:[%s172 + $0x4] sm:$0xf] %v333
      %370 = vst [vmem:[%s172 + $0x8] sm:$0xf] %v334
      %371 = vst [vmem:[%s172 + $0xc] sm:$0xf] %v335
      %372 = vst [vmem:[%s172 + $0x10] sm:$0xf] %v336
      %373 = vst [vmem:[%s172 + $0x14] sm:$0xf] %v337
      %374 = vst [vmem:[%s172 + $0x18] sm:$0xf] %v338
      %375 = vst [vmem:[%s172 + $0x1c] sm:$0xf] %v339
      %376 = vst [vmem:[%s172 + $0x20] sm:$0xf] %v340
      %377 = vst [vmem:[%s172 + $0x24] sm:$0xf] %v341
      %378 = vst [vmem:[%s172 + $0x28] sm:$0xf] %v342
      %379 = vst [vmem:[%s172 + $0x2c] sm:$0xf] %v343
      %380 = vst [vmem:[%s172 + $0x30] sm:$0xf] %v344
      %381 = vst [vmem:[%s172 + $0x34] sm:$0xf] %v345
      %382 = vst [vmem:[%s172 + $0x38] sm:$0xf] %v346
      %383 = vst [vmem:[%s172 + $0x3c] sm:$0xf] %v347
      %384 = vst [vmem:[%s172 + $0x40] sm:$0xf] %v348
      %385 = vst [vmem:[%s172 + $0x44] sm:$0xf] %v349
      %s386 = smul.u32 18, %s14
      %p387 = scmp.lt.s32.totalorder %s386, 71
      %s388 = scalar_select %p387, %s386, 71
      %s389 = smul.addr %s388, 4
      %s390 = scalar_lea.vmem %s3, %s389
      // Predicated region
      $region33: #{cna_forward.3} parent=31 // pred_check
        %p391 = pneg %p100
      $region34: #{cna_forward.3} parent=31 // pred_check_branch
        %393 = sbr.rel (%p391) target = $region36
      $region35: #{cna_forward.3} parent=31 // pred_region
        %s394 = smul.u32 18, %s14
      $region36: #{cna_forward.3} parent=31 // pred_fallthru
        _
    $region32: #{cna_forward.3} parent=5 // pred_fallthru
      _
    %p395 = scmp.le.s32.totalorder 2, %s9
    // Predicated region
    $region37: #{cna_forward.3} parent=5 // pred_check
      %p396 = pneg %p395
    $region38: #{cna_forward.3} parent=5 // pred_check_branch
      %398 = sbr.rel (%p396) target = $region40
    $region39: #{cna_forward.3} parent=5 // pred_region
      %s399 = ssub.s32 %s9, 2
      // Predicated region
      $region41: #{cna_forward.3} parent=39 // pred_check
        %p400 = pneg %p106
      $region42: #{cna_forward.3} parent=39 // pred_check_branch
        %402 = sbr.rel (%p400) target = $region44
      $region43: #{cna_forward.3} parent=39 // pred_region
        %s403 = smul.u32 18, %s15
        %p404 = scmp.lt.s32.totalorder %s403, 71
        %s405 = scalar_select %p404, %s403, 71
        %s406 = smul.addr %s405, 4
        %s407 = scalar_lea.vmem %s3, %s406
      $region44: #{cna_forward.3} parent=39 // pred_fallthru
        _
    $region40: #{cna_forward.3} parent=5 // pred_fallthru
      _
  $region6: #{cna_forward.3} parent=0 // loop_footer
    %s13 = sadd.s32 1, %s9
  $region7: #{cna_forward.3} parent=0 // loop_footer_branch
    %8 = sbr.rel target = $region3
  $region8: #{cna_forward.3} parent=0 // loop_exit
    _

// kernel: cna_forward.2
$region0: #{cna_forward.2}
  #allocation0 [shape = 'u32[]', space=smem, size = 0x4, offset = 0x4, fixed_abs, tag = 'smem constant byte address 0x4 - core index']
  #allocation1 [shape = 'u32[144,128]{1,0:T(1,128)}', space=vmem, size = 0x12000, scoped, tag = 'internal scratch']
  %s0 = inlined_call_operand.vmem [shape: bf16[864,4], index: 0, kind: input, shape index: {}, may-alias: {0,1}]
  %s1 = inlined_call_operand.vmem [shape: bf16[864,4], index: 1, kind: input, shape index: {}, may-alias: {0,1}]
  %s2 = inlined_call_operand.vmem [shape: bf16[9,4,128], index: 2, kind: input, shape index: {}]
  %s3 = inlined_call_operand.vmem [shape: f32[1,128], index: 3, kind: input, shape index: {}]
  %s4 = inlined_call_operand.vmem [shape: f32[576,1], index: 4, kind: input, shape index: {}]
  %s5 = inlined_call_operand.vmem [shape: bf16[576,128], index: 5, kind: output, shape index: {0}]
  %s6 = inlined_call_operand.vmem [shape: f32[2,1,128], index: 6, kind: output, shape index: {1}]
  %s7 = inlined_call_operand.vmem [shape: f32[2,1,128], index: 7, kind: output, shape index: {2}]
  %8 = xla_tuple %s5, %s6, %s7
  %s9 = sld [smem:[#allocation0]]
  $region73: #{cna_forward.2} parent=0
    _
  %s11 = ssub.s32 1, %s9
  %s12 = scalar_select 0, %s11, %s9
  loop: start=0, step=1, limit=6
  $region2: #{cna_forward.2} parent=0 // loop_pre_header
    _
  $region3: #{cna_forward.2} parent=0 // loop_header
    %s14 = sphi 0, %s18
    %p15 = scmp.ge.s32.totalorder %s14, 6
    %s21 = sphi 0, %s33
    %s22 = sphi 0, %s29
    %s23 = sphi 0, %s21
    %s24 = sphi 0, %s22
    %s25 = sphi 0, %s23
    %s26 = sphi 0, %s24
    %s40 = sphi 0, %s42
    %s43 = sphi 0, %s40
    %s44 = sphi 0, %s43
    %s60 = sphi 0, %s44
    %s72 = sphi 0, %s74
    %s75 = sphi 0, %s72
    %s76 = sphi 0, %s75
    %s92 = sphi 0, %s76
    %s96 = sphi 0, %s96
    %s98 = sphi 0, %s96
    %s99 = sphi 0, %s98
    %s113 = sphi 0, %s99
    %s117 = sphi 0, %s117
    %s119 = sphi 0, %s117
    %s120 = sphi 0, %s119
    %s134 = sphi 0, %s120
    %s144 = sphi 0, %s146
    %s147 = sphi 0, %s144
    %s148 = sphi 0, %s147
    %s164 = sphi 0, %s148
    %s174 = sphi 0, %s176
    %s177 = sphi 0, %s174
    %s178 = sphi 0, %s177
    %s194 = sphi 0, %s178
    %s200 = sphi 0, %s202
    %s203 = sphi 0, %s200
    %s204 = sphi 0, %s203
    %s220 = sphi 0, %s204
    %s226 = sphi 0, %s228
    %s229 = sphi 0, %s226
    %s230 = sphi 0, %s229
    %s246 = sphi 0, %s230
  $region4: #{cna_forward.2} parent=0 // loop_header_branch
    %17 = sbr.rel (%p15) target = $region8
  $region5: #{cna_forward.2} parent=0 // loop_body
    %s19 = ssub.s32 %s14, 1
    %s20 = ssub.s32 %s14, 2
    %s27 = sadd.s32 1, %s22
    %p28 = scmp.ge.s32.totalorder %s27, 2
    %s29 = scalar_select %p28, 0, %s27
    %s30 = sadd.s32 1, %s21
    %s31 = scalar_select %p28, %s30, %s21
    %p32 = scmp.ge.s32.totalorder %s31, 2
    %s33 = scalar_select %p32, 0, %s31
    %s34 = smul.u32 %s21, 3
    %s35 = sadd.s32 %s34, %s22
    %s36 = smul.u32 %s33, 3
    %s37 = sadd.s32 %s36, %s29
    %s38 = ssub.s32 %s35, %s37
    %p39 = scmp.eq.s32.totalorder %s38, 0
    %s41 = sadd.s32 %s40, 1
    %s42 = scalar_select %p39, %s40, %s41
    %p45 = pneg %p39
    %p46 = scmp.eq.s32.totalorder %s14, 3
    %p47 = por %p45, %p46
    %p48 = scmp.ne.s32.totalorder %s40, %s43
    %p49 = scmp.eq.s32.totalorder %s14, 0
    %p50 = por %p48, %p49
    %p51 = scmp.ne.s32.totalorder %s40, %s43
    %p52 = scmp.eq.s32.totalorder %s19, 3
    %p53 = por %p51, %p52
    %p54 = scmp.ne.s32.totalorder %s43, %s44
    %p55 = scmp.eq.s32.totalorder %s19, 0
    %p56 = por %p54, %p55
    %p57 = scmp.ne.s32.totalorder %s43, %s44
    %p58 = scmp.eq.s32.totalorder %s20, 3
    %p59 = por %p57, %p58
    %p61 = scmp.ne.s32.totalorder %s44, %s60
    %p62 = scmp.eq.s32.totalorder %s20, 0
    %p63 = por %p61, %p62
    %s64 = smul.u32 %s21, 3
    %s65 = sadd.s32 %s64, %s22
    %s66 = sadd.s32 %s65, 1
    %s67 = smul.u32 %s33, 3
    %s68 = sadd.s32 %s67, %s29
    %s69 = sadd.s32 %s68, 1
    %s70 = ssub.s32 %s66, %s69
    %p71 = scmp.eq.s32.totalorder %s70, 0
    %s73 = sadd.s32 %s72, 1
    %s74 = scalar_select %p71, %s72, %s73
    %p77 = pneg %p71
    %p78 = scmp.eq.s32.totalorder %s14, 3
    %p79 = por %p77, %p78
    %p80 = scmp.ne.s32.totalorder %s72, %s75
    %p81 = scmp.eq.s32.totalorder %s14, 0
    %p82 = por %p80, %p81
    %p83 = scmp.ne.s32.totalorder %s72, %s75
    %p84 = scmp.eq.s32.totalorder %s19, 3
    %p85 = por %p83, %p84
    %p86 = scmp.ne.s32.totalorder %s75, %s76
    %p87 = scmp.eq.s32.totalorder %s19, 0
    %p88 = por %p86, %p87
    %p89 = scmp.ne.s32.totalorder %s75, %s76
    %p90 = scmp.eq.s32.totalorder %s20, 3
    %p91 = por %p89, %p90
    %p93 = scmp.ne.s32.totalorder %s76, %s92
    %p94 = scmp.eq.s32.totalorder %s20, 0
    %p95 = por %p93, %p94
    %s97 = sadd.s32 %s96, 1
    %p100 = scmp.eq.s32.totalorder %s14, 3
    %p101 = scmp.ne.s32.totalorder %s96, %s98
    %p102 = scmp.eq.s32.totalorder %s14, 0
    %p103 = por %p101, %p102
    %p104 = scmp.ne.s32.totalorder %s96, %s98
    %p105 = scmp.eq.s32.totalorder %s19, 3
    %p106 = por %p104, %p105
    %p107 = scmp.ne.s32.totalorder %s98, %s99
    %p108 = scmp.eq.s32.totalorder %s19, 0
    %p109 = por %p107, %p108
    %p110 = scmp.ne.s32.totalorder %s98, %s99
    %p111 = scmp.eq.s32.totalorder %s20, 3
    %p112 = por %p110, %p111
    %p114 = scmp.ne.s32.totalorder %s99, %s113
    %p115 = scmp.eq.s32.totalorder %s20, 0
    %p116 = por %p114, %p115
    %s118 = sadd.s32 %s117, 1
    %p121 = scmp.eq.s32.totalorder %s14, 3
    %p122 = scmp.ne.s32.totalorder %s117, %s119
    %p123 = scmp.eq.s32.totalorder %s14, 0
    %p124 = por %p122, %p123
    %p125 = scmp.ne.s32.totalorder %s117, %s119
    %p126 = scmp.eq.s32.totalorder %s19, 3
    %p127 = por %p125, %p126
    %p128 = scmp.ne.s32.totalorder %s119, %s120
    %p129 = scmp.eq.s32.totalorder %s19, 0
    %p130 = por %p128, %p129
    %p131 = scmp.ne.s32.totalorder %s119, %s120
    %p132 = scmp.eq.s32.totalorder %s20, 3
    %p133 = por %p131, %p132
    %p135 = scmp.ne.s32.totalorder %s120, %s134
    %p136 = scmp.eq.s32.totalorder %s20, 0
    %p137 = por %p135, %p136
    %s138 = smul.u32 %s21, 2
    %s139 = sadd.s32 %s138, %s22
    %s140 = smul.u32 %s33, 2
    %s141 = sadd.s32 %s140, %s29
    %s142 = ssub.s32 %s139, %s141
    %p143 = scmp.eq.s32.totalorder %s142, 0
    %s145 = sadd.s32 %s144, 1
    %s146 = scalar_select %p143, %s144, %s145
    %p149 = pneg %p143
    %p150 = scmp.eq.s32.totalorder %s14, 3
    %p151 = por %p149, %p150
    %p152 = scmp.ne.s32.totalorder %s144, %s147
    %p153 = scmp.eq.s32.totalorder %s14, 0
    %p154 = por %p152, %p153
    %p155 = scmp.ne.s32.totalorder %s144, %s147
    %p156 = scmp.eq.s32.totalorder %s19, 3
    %p157 = por %p155, %p156
    %p158 = scmp.ne.s32.totalorder %s147, %s148
    %p159 = scmp.eq.s32.totalorder %s19, 0
    %p160 = por %p158, %p159
    %p161 = scmp.ne.s32.totalorder %s147, %s148
    %p162 = scmp.eq.s32.totalorder %s20, 3
    %p163 = por %p161, %p162
    %p165 = scmp.ne.s32.totalorder %s148, %s164
    %p166 = scmp.eq.s32.totalorder %s20, 0
    %p167 = por %p165, %p166
    %s168 = smul.u32 %s21, 2
    %s169 = sadd.s32 %s168, %s22
    %s170 = smul.u32 %s33, 2
    %s171 = sadd.s32 %s170, %s29
    %s172 = ssub.s32 %s169, %s171
    %p173 = scmp.eq.s32.totalorder %s172, 0
    %s175 = sadd.s32 %s174, 1
    %s176 = scalar_select %p173, %s174, %s175
    %p179 = pneg %p173
    %p180 = scmp.eq.s32.totalorder %s14, 3
    %p181 = por %p179, %p180
    %p182 = scmp.ne.s32.totalorder %s174, %s177
    %p183 = scmp.eq.s32.totalorder %s14, 0
    %p184 = por %p182, %p183
    %p185 = scmp.ne.s32.totalorder %s174, %s177
    %p186 = scmp.eq.s32.totalorder %s19, 3
    %p187 = por %p185, %p186
    %p188 = scmp.ne.s32.totalorder %s177, %s178
    %p189 = scmp.eq.s32.totalorder %s19, 0
    %p190 = por %p188, %p189
    %p191 = scmp.ne.s32.totalorder %s177, %s178
    %p192 = scmp.eq.s32.totalorder %s20, 3
    %p193 = por %p191, %p192
    %p195 = scmp.ne.s32.totalorder %s178, %s194
    %p196 = scmp.eq.s32.totalorder %s20, 0
    %p197 = por %p195, %p196
    %s198 = ssub.s32 %s21, %s33
    %p199 = scmp.eq.s32.totalorder %s198, 0
    %s201 = sadd.s32 %s200, 1
    %s202 = scalar_select %p199, %s200, %s201
    %p205 = pneg %p199
    %p206 = scmp.eq.s32.totalorder %s14, 3
    %p207 = por %p205, %p206
    %p208 = scmp.ne.s32.totalorder %s200, %s203
    %p209 = scmp.eq.s32.totalorder %s14, 0
    %p210 = por %p208, %p209
    %p211 = scmp.ne.s32.totalorder %s200, %s203
    %p212 = scmp.eq.s32.totalorder %s19, 3
    %p213 = por %p211, %p212
    %p214 = scmp.ne.s32.totalorder %s203, %s204
    %p215 = scmp.eq.s32.totalorder %s19, 0
    %p216 = por %p214, %p215
    %p217 = scmp.ne.s32.totalorder %s203, %s204
    %p218 = scmp.eq.s32.totalorder %s20, 3
    %p219 = por %p217, %p218
    %p221 = scmp.ne.s32.totalorder %s204, %s220
    %p222 = scmp.eq.s32.totalorder %s20, 0
    %p223 = por %p221, %p222
    %s224 = ssub.s32 %s21, %s33
    %p225 = scmp.eq.s32.totalorder %s224, 0
    %s227 = sadd.s32 %s226, 1
    %s228 = scalar_select %p225, %s226, %s227
    %p231 = pneg %p225
    %p232 = scmp.eq.s32.totalorder %s14, 3
    %p233 = por %p231, %p232
    %p234 = scmp.ne.s32.totalorder %s226, %s229
    %p235 = scmp.eq.s32.totalorder %s14, 0
    %p236 = por %p234, %p235
    %p237 = scmp.ne.s32.totalorder %s226, %s229
    %p238 = scmp.eq.s32.totalorder %s19, 3
    %p239 = por %p237, %p238
    %p240 = scmp.ne.s32.totalorder %s229, %s230
    %p241 = scmp.eq.s32.totalorder %s19, 0
    %p242 = por %p240, %p241
    %p243 = scmp.ne.s32.totalorder %s229, %s230
    %p244 = scmp.eq.s32.totalorder %s20, 3
    %p245 = por %p243, %p244
    %p247 = scmp.ne.s32.totalorder %s230, %s246
    %p248 = scmp.eq.s32.totalorder %s20, 0
    %p249 = por %p247, %p248
    %p250 = scmp.le.s32.totalorder 1, %s14
    %p251 = scmp.lt.s32.totalorder %s14, 5
    %p252 = pnand %p250, %p251
    %p253 = pneg %p252
    // Predicated region
    $region9: #{cna_forward.2} parent=5 // pred_check
      _
    $region10: #{cna_forward.2} parent=5 // pred_check_branch
      %255 = sbr.rel (%p252) target = $region12
    $region11: #{cna_forward.2} parent=5 // pred_region
      %s256 = ssub.s32 %s14, 1
      // Predicated region
      $region13: #{cna_forward.2} parent=11 // pred_check
        %p257 = pneg %p109
      $region14: #{cna_forward.2} parent=11 // pred_check_branch
        %259 = sbr.rel (%p257) target = $region16
      $region15: #{cna_forward.2} parent=11 // pred_region
        _
      $region16: #{cna_forward.2} parent=11 // pred_fallthru
        _
      // Predicated region
      $region17: #{cna_forward.2} parent=11 // pred_check
        %p260 = pneg %p130
      $region18: #{cna_forward.2} parent=11 // pred_check_branch
        %262 = sbr.rel (%p260) target = $region20
      $region19: #{cna_forward.2} parent=11 // pred_region
        _
      $region20: #{cna_forward.2} parent=11 // pred_fallthru
        _
    $region12: #{cna_forward.2} parent=5 // pred_fallthru
      _
    %p263 = scmp.lt.s32.totalorder %s14, 4
    // Predicated region
    $region21: #{cna_forward.2} parent=5 // pred_check
      %p264 = pneg %p263
    $region22: #{cna_forward.2} parent=5 // pred_check_branch
      %266 = sbr.rel (%p264) target = $region24
    $region23: #{cna_forward.2} parent=5 // pred_region
      // Predicated region
      $region25: #{cna_forward.2} parent=23 // pred_check
        %p267 = pneg %p50
      $region26: #{cna_forward.2} parent=23 // pred_check_branch
        %269 = sbr.rel (%p267) target = $region28
      $region27: #{cna_forward.2} parent=23 // pred_region
        %s270 = smul.u32 %s21, 3
        %s271 = sadd.s32 %s270, %s22
        %s272 = smul.u32 18, %s271
        %p273 = scmp.lt.s32.totalorder %s272, 107
        %s274 = scalar_select %p273, %s272, 107
        %s275 = smul.addr %s274, 4
        %s276 = scalar_lea.vmem %s0, %s275
        %s277 = smul.u32 %s21, 3
        %s278 = sadd.s32 %s277, %s22
        %s279 = smul.u32 18, %s278
      $region28: #{cna_forward.2} parent=23 // pred_fallthru
        _
      // Predicated region
      $region29: #{cna_forward.2} parent=23 // pred_check
        %p280 = pneg %p82
      $region30: #{cna_forward.2} parent=23 // pred_check_branch
        %282 = sbr.rel (%p280) target = $region32
      $region31: #{cna_forward.2} parent=23 // pred_region
        %s283 = smul.u32 %s21, 3
        %s284 = sadd.s32 %s283, %s22
        %s285 = sadd.s32 %s284, 1
        %s286 = smul.u32 18, %s285
        %p287 = scmp.lt.s32.totalorder %s286, 107
        %s288 = scalar_select %p287, %s286, 107
        %s289 = smul.addr %s288, 4
        %s290 = scalar_lea.vmem %s1, %s289
        %s291 = smul.u32 %s21, 3
        %s292 = sadd.s32 %s291, %s22
        %s293 = sadd.s32 %s292, 1
        %s294 = smul.u32 18, %s293
      $region32: #{cna_forward.2} parent=23 // pred_fallthru
        _
      // Predicated region
      $region33: #{cna_forward.2} parent=23 // pred_check
        %p295 = pneg %p154
      $region34: #{cna_forward.2} parent=23 // pred_check_branch
        %297 = sbr.rel (%p295) target = $region36
      $region35: #{cna_forward.2} parent=23 // pred_region
        %s298 = smul.u32 %s21, 2
        %s299 = sadd.s32 %s298, %s22
        %s300 = smul.u32 18, %s299
        %p301 = scmp.lt.s32.totalorder %s300, 71
        %s302 = scalar_select %p301, %s300, 71
        %s303 = smul.addr %s302, 8
        %s304 = scalar_lea.vmem %s4, %s303
        %s305 = smul.u32 %s21, 2
        %s306 = sadd.s32 %s305, %s22
        %s307 = smul.u32 18, %s306
      $region36: #{cna_forward.2} parent=23 // pred_fallthru
        _
    $region24: #{cna_forward.2} parent=5 // pred_fallthru
      _
    %p308 = scmp.le.s32.totalorder 1, %s14
    %p309 = scmp.lt.s32.totalorder %s14, 5
    %p310 = pnand %p308, %p309
    %p311 = pneg %p310
    // Predicated region
    $region37: #{cna_forward.2} parent=5 // pred_check
      _
    $region38: #{cna_forward.2} parent=5 // pred_check_branch
      %313 = sbr.rel (%p310) target = $region40
    $region39: #{cna_forward.2} parent=5 // pred_region
      %s314 = ssub.s32 %s14, 1
      %s315 = smul.u32 %s23, 3
      %s316 = sadd.s32 %s315, %s24
      %s317 = smul.u32 18, %s316
      %p318 = scmp.lt.s32.totalorder %s317, 107
      %s319 = scalar_select %p318, %s317, 107
      %s320 = smul.addr %s319, 4
      %s321 = scalar_lea.vmem %s0, %s320
      %p322 = pneg %p56
      %p323 = pneg %p53
      %s324 = smul.u32 %s23, 3
      %s325 = sadd.s32 %s324, %s24
      %s326 = sadd.s32 %s325, 1
      %s327 = smul.u32 18, %s326
      %p328 = scmp.lt.s32.totalorder %s327, 107
      %s329 = scalar_select %p328, %s327, 107
      %s330 = smul.addr %s329, 4
      %s331 = scalar_lea.vmem %s1, %s330
      %p332 = pneg %p88
      %p333 = pneg %p85
      %p334 = pneg %p109
      %p335 = pneg %p106
      %p336 = pneg %p130
      %p337 = pneg %p127
      %s338 = smul.u32 %s23, 2
      %s339 = sadd.s32 %s338, %s24
      %s340 = smul.u32 18, %s339
      %p341 = scmp.lt.s32.totalorder %s340, 71
      %s342 = scalar_select %p341, %s340, 71
      %s343 = smul.addr %s342, 8
      %s344 = scalar_lea.vmem %s4, %s343
      %p345 = pneg %p160
      %p346 = pneg %p157
      %p347 = pneg %p190
      %p348 = pneg %p187
      %s349 = smul.u32 %s23, 2
      %s350 = sadd.s32 %s349, %s24
      %s351 = smul.u32 18, %s350
      %p352 = scmp.lt.s32.totalorder %s351, 71
      %s353 = scalar_select %p352, %s351, 71
      %s354 = smul.addr %s353, 4
      %s355 = scalar_lea.vmem %s5, %s354
      %p356 = pneg %p216
      %p357 = pneg %p213
      %p358 = scmp.lt.s32.totalorder %s23, 1
      %s359 = scalar_select %p358, %s23, 1
      %s360 = scalar_lea.vmem %s6, %s359
      %p361 = pneg %p242
      %p362 = pneg %p239
      %p363 = scmp.lt.s32.totalorder %s23, 1
      %s364 = scalar_select %p363, %s23, 1
      %s365 = scalar_lea.vmem %s7, %s364
      %s366 = smul.u32 %s23, 3
      %s367 = sadd.s32 %s366, %s24
      %s368 = smul.u32 18, %s367
      %p369 = scmp.lt.s32.totalorder %s368, 107
      %s370 = scalar_select %p369, %s368, 107
      %s371 = smul.addr %s370, 4
      %s372 = scalar_lea.vmem %s0, %s371
      %s373 = smul.u32 %s23, 3
      %s374 = sadd.s32 %s373, %s24
      %s375 = smul.u32 18, %s374
      %s376 = smul.u32 %s23, 3
      %s377 = sadd.s32 %s376, %s24
      %s378 = sadd.s32 %s377, 1
      %s379 = smul.u32 18, %s378
      %p380 = scmp.lt.s32.totalorder %s379, 107
      %s381 = scalar_select %p380, %s379, 107
      %s382 = smul.addr %s381, 4
      %s383 = scalar_lea.vmem %s1, %s382
      %s384 = smul.u32 %s23, 3
      %s385 = sadd.s32 %s384, %s24
      %s386 = sadd.s32 %s385, 1
      %s387 = smul.u32 18, %s386
      %s388 = smul.u32 %s23, 2
      %s389 = sadd.s32 %s388, %s24
      %s390 = smul.u32 18, %s389
      %p391 = scmp.lt.s32.totalorder %s390, 71
      %s392 = scalar_select %p391, %s390, 71
      %s393 = smul.addr %s392, 8
      %s394 = scalar_lea.vmem %s4, %s393
      %s395 = smul.u32 %s23, 2
      %s396 = sadd.s32 %s395, %s24
      %s397 = smul.u32 18, %s396
      %s398 = smul.u32 %s23, 2
      %s399 = sadd.s32 %s398, %s24
      %s400 = smul.u32 18, %s399
      %p401 = scmp.lt.s32.totalorder %s400, 71
      %s402 = scalar_select %p401, %s400, 71
      %s403 = smul.addr %s402, 4
      %s404 = scalar_lea.vmem %s5, %s403
      %s405 = smul.u32 %s23, 2
      %s406 = sadd.s32 %s405, %s24
      %s407 = smul.u32 18, %s406
      %p408 = scmp.lt.s32.totalorder %s23, 1
      %s409 = scalar_select %p408, %s23, 1
      %s410 = scalar_lea.vmem %s6, %s409
      %p411 = scmp.lt.s32.totalorder %s23, 1
      %s412 = scalar_select %p411, %s23, 1
      %s413 = scalar_lea.vmem %s7, %s412
      %p415 = scmp.eq.s32.totalorder %s24, 0
      // Predicated region
      $region41: #{cna_forward.2} parent=39 // pred_check
        %p416 = pneg %p415
      $region42: #{cna_forward.2} parent=39 // pred_check_branch
        %418 = sbr.rel (%p416) target = $region44
      $region43: #{cna_forward.2} parent=39 // pred_region
        %419 = vst [vmem:[%s410] sm:$0x1] 0.0
        %420 = vst [vmem:[%s413] sm:$0x1] 0.0
      $region44: #{cna_forward.2} parent=39 // pred_fallthru
        _
      %v421 = vld [vmem:[%s372] sm:$0xf]
      %v422 = vld [vmem:[%s372 + $0x4] sm:$0xf]
      %v423 = vld [vmem:[%s372 + $0x8] sm:$0xf]
      %v424 = vld [vmem:[%s372 + $0xc] sm:$0xf]
      %v425 = vld [vmem:[%s372 + $0x10] sm:$0xf]
      %v426 = vld [vmem:[%s372 + $0x14] sm:$0xf]
      %v427 = vld [vmem:[%s372 + $0x18] sm:$0xf]
      %v428 = vld [vmem:[%s372 + $0x1c] sm:$0xf]
      %v429 = vld [vmem:[%s372 + $0x20] sm:$0xf]
      %v430 = vld [vmem:[%s372 + $0x24] sm:$0xf]
      %v431 = vld [vmem:[%s372 + $0x28] sm:$0xf]
      %v432 = vld [vmem:[%s372 + $0x2c] sm:$0xf]
      %v433 = vld [vmem:[%s372 + $0x30] sm:$0xf]
      %v434 = vld [vmem:[%s372 + $0x34] sm:$0xf]
      %v435 = vld [vmem:[%s372 + $0x38] sm:$0xf]
      %v436 = vld [vmem:[%s372 + $0x3c] sm:$0xf]
      %v437 = vld [vmem:[%s372 + $0x40] sm:$0xf]
      %v438 = vld [vmem:[%s372 + $0x44] sm:$0xf]
      %v439 = vunpack.c.l.bf16 %v421
      %v440 = vunpack.c.l.bf16 %v422
      %v441 = vunpack.c.l.bf16 %v423
      %v442 = vunpack.c.l.bf16 %v424
      %v443 = vunpack.c.l.bf16 %v425
      %v444 = vunpack.c.l.bf16 %v426
      %v445 = vunpack.c.l.bf16 %v427
      %v446 = vunpack.c.l.bf16 %v428
      %v447 = vunpack.c.l.bf16 %v429
      %v448 = vunpack.c.l.bf16 %v430
      %v449 = vunpack.c.l.bf16 %v431
      %v450 = vunpack.c.l.bf16 %v432
      %v451 = vunpack.c.l.bf16 %v433
      %v452 = vunpack.c.l.bf16 %v434
      %v453 = vunpack.c.l.bf16 %v435
      %v454 = vunpack.c.l.bf16 %v436
      %v455 = vunpack.c.l.bf16 %v437
      %v456 = vunpack.c.l.bf16 %v438
      %v457 = vld [vmem:[%s383] sm:$0xf]
      %v458 = vld [vmem:[%s383 + $0x4] sm:$0xf]
      %v459 = vld [vmem:[%s383 + $0x8] sm:$0xf]
      %v460 = vld [vmem:[%s383 + $0xc] sm:$0xf]
      %v461 = vld [vmem:[%s383 + $0x10] sm:$0xf]
      %v462 = vunpack.c.l.bf16 %v457
      %v463 = vunpack.c.l.bf16 %v458
      %v464 = vunpack.c.l.bf16 %v459
      %v465 = vunpack.c.l.bf16 %v460
      %v466 = vunpack.c.l.bf16 %v461
      %v467 = vpack.c.bf16 %v440, %v439
      %v468 = vpack.c.bf16 %v442, %v441
      %v469 = vpack.c.bf16 %v444, %v443
      %v470 = vpack.c.bf16 %v446, %v445
      %v471 = vpack.c.bf16 %v448, %v447
      %v472 = vpack.c.bf16 %v450, %v449
      %v473 = vpack.c.bf16 %v452, %v451
      %v474 = vpack.c.bf16 %v454, %v453
      %v475 = vpack.c.bf16 %v456, %v455
      %v476 = vld [vmem:[%s2] sm:$0x3]
      %v477 = vpack.c.bf16 %v462, %v462
      %s478 = scalar_lea.vmem %s2, 2
      %v479 = vld [vmem:[%s478] sm:$0x3]
      %vm480 = vsmask.f32 7424
      %v482 = vshrl.u32 %v467, 16
      %v484 = vshll.u32 %v467, 16
      %v486 = vrot.slane %v484, 1
      %v487 = vor.u32 %v482, %v486
      %v489 = vshll.u32 %v468, 16
      %v491 = vrot.slane %v489, 1
      %v492 = vsel %vm480, %v487, %v491
      %v493 = vshrl.u32 %v468, 16
      %v495 = vor.u32 %v493, %v491
      %v497 = vshll.u32 %v469, 16
      %v499 = vrot.slane %v497, 1
      %v500 = vsel %vm480, %v495, %v499
      %v501 = vshrl.u32 %v469, 16
      %v503 = vor.u32 %v501, %v499
      %v505 = vshll.u32 %v470, 16
      %v507 = vrot.slane %v505, 1
      %v508 = vsel %vm480, %v503, %v507
      %v509 = vshrl.u32 %v470, 16
      %v511 = vor.u32 %v509, %v507
      %v513 = vshll.u32 %v471, 16
      %v515 = vrot.slane %v513, 1
      %v516 = vsel %vm480, %v511, %v515
      %v517 = vshrl.u32 %v471, 16
      %v519 = vor.u32 %v517, %v515
      %v521 = vshll.u32 %v472, 16
      %v523 = vrot.slane %v521, 1
      %v524 = vsel %vm480, %v519, %v523
      %v525 = vshrl.u32 %v472, 16
      %v527 = vor.u32 %v525, %v523
      %v529 = vshll.u32 %v473, 16
      %v531 = vrot.slane %v529, 1
      %v532 = vsel %vm480, %v527, %v531
      %v533 = vshrl.u32 %v473, 16
      %v535 = vor.u32 %v533, %v531
      %v537 = vshll.u32 %v474, 16
      %v539 = vrot.slane %v537, 1
      %v540 = vsel %vm480, %v535, %v539
      %v541 = vshrl.u32 %v474, 16
      %v543 = vor.u32 %v541, %v539
      %v545 = vshll.u32 %v475, 16
      %v547 = vrot.slane %v545, 1
      %v548 = vsel %vm480, %v543, %v547
      %v549 = vshrl.u32 %v475, 16
      %v551 = vor.u32 %v549, %v547
      %v553 = vshll.u32 %v477, 16
      %v555 = vrot.slane %v553, 1
      %v556 = vsel %vm480, %v551, %v555
      %vm557 = vcmask 31744
      %v559 = vsel %vm557, %v492, 0
      %v562 = vsel %vm557, %v500, 0
      %v565 = vsel %vm557, %v508, 0
      %v568 = vsel %vm557, %v516, 0
      %v571 = vsel %vm557, %v524, 0
      %v574 = vsel %vm557, %v532, 0
      %v577 = vsel %vm557, %v540, 0
      %v580 = vsel %vm557, %v548, 0
      %v583 = vsel %vm557, %v556, 0
      %vm585 = vcmask 1041408
      %v587 = vsel %vm585, %v479, 0
      %589 = vmatprep.subr.bf16.mxu0 0
      %590 = vmatpush1.bf16.msra.mxu0 %v587
      %591 = vmatprep.subr.bf16.mxu0 0
      %592 = vmatpush1.bf16.msra.mxu0 0
      %593 = vmatprep.subr.bf16.mxu0 0
      %594 = vmatpush1.bf16.msra.mxu0 0
      %595 = vmatprep.subr.bf16.mxu0 0
      %596 = vmatpush1.bf16.msra.mxu0 0
      %597 = vmatprep.subr.bf16.mxu0 0
      %598 = vmatpush1.bf16.msra.mxu0 0
      %599 = vmatprep.subr.bf16.mxu0 0
      %600 = vmatpush1.bf16.msra.mxu0 0
      %601 = vmatprep.subr.bf16.mxu0 0
      %602 = vmatpush1.bf16.msra.mxu0 0
      %603 = vmatprep.subr.bf16.mxu0 0
      %604 = vmatpush1.bf16.msra.mxu0 0
      %605 = vmatprep.subr.bf16.mxu0 0
      %606 = vmatpush1.bf16.msra.mxu0 0
      %607 = vmatprep.subr.bf16.mxu0 0
      %608 = vmatpush1.bf16.msra.mxu0 0
      %609 = vmatprep.subr.bf16.mxu0 0
      %610 = vmatpush1.bf16.msra.mxu0 0
      %611 = vmatprep.subr.bf16.mxu0 0
      %612 = vmatpush1.bf16.msra.mxu0 0
      %613 = vmatprep.subr.bf16.mxu0 0
      %614 = vmatpush1.bf16.msra.mxu0 0
      %615 = vmatprep.subr.bf16.mxu0 0
      %616 = vmatpush1.bf16.msra.mxu0 0
      %617 = vmatprep.subr.bf16.mxu0 0
      %618 = vmatpush1.bf16.msra.mxu0 0
      %619 = vmatprep.subr.bf16.mxu0 0
      %620 = vmatpush1.bf16.msra.mxu0 0
      %621 = vmatprep.mubr.bf16.mxu0 0
      %622 = vmatmul.mubr.bf16.gmra.mrb[0].mxu0 %v559
      %v623 = vpop.f32.mrb[0].mxu0
      %v624 = vadd.f32 0.0, %v623
      %v625 = vpop.f32.mrb[0].mxu0
      %v626 = vpop.f32.mrb[0].mxu0
      %v627 = vadd.f32 0.0, %v626
      %v628 = vpop.f32.mrb[0].mxu0
      %629 = vmatprep.mubr.bf16.mxu0 0
      %630 = vmatmul.mubr.bf16.gmra.mrb[0].mxu0 %v562
      %v631 = vpop.f32.mrb[0].mxu0
      %v632 = vadd.f32 0.0, %v631
      %v633 = vpop.f32.mrb[0].mxu0
      %v634 = vpop.f32.mrb[0].mxu0
      %v635 = vadd.f32 0.0, %v634
      %v636 = vpop.f32.mrb[0].mxu0
      %637 = vmatprep.mubr.bf16.mxu0 0
      %638 = vmatmul.mubr.bf16.gmra.mrb[0].mxu0 %v565
      %v639 = vpop.f32.mrb[0].mxu0
      %v640 = vadd.f32 0.0, %v639
      %v641 = vpop.f32.mrb[0].mxu0
      %v642 = vpop.f32.mrb[0].mxu0
      %v643 = vadd.f32 0.0, %v642
      %v644 = vpop.f32.mrb[0].mxu0
      %645 = vmatprep.mubr.bf16.mxu0 0
      %646 = vmatmul.mubr.bf16.gmra.mrb[0].mxu0 %v568
      %v647 = vpop.f32.mrb[0].mxu0
      %v648 = vadd.f32 0.0, %v647
      %v649 = vpop.f32.mrb[0].mxu0
      %v650 = vpop.f32.mrb[0].mxu0
      %v651 = vadd.f32 0.0, %v650
      %v652 = vpop.f32.mrb[0].mxu0
      %653 = vmatprep.mubr.bf16.mxu0 0
      %654 = vmatmul.mubr.bf16.gmra.mrb[0].mxu0 %v571
      %v655 = vpop.f32.mrb[0].mxu0
      %v656 = vadd.f32 0.0, %v655
      %v657 = vpop.f32.mrb[0].mxu0
      %v658 = vpop.f32.mrb[0].mxu0
      %v659 = vadd.f32 0.0, %v658
      %v660 = vpop.f32.mrb[0].mxu0
      %661 = vmatprep.mubr.bf16.mxu0 0
      %662 = vmatmul.mubr.bf16.gmra.mrb[0].mxu0 %v574
      %v663 = vpop.f32.mrb[0].mxu0
      %v664 = vadd.f32 0.0, %v663
      %v665 = vpop.f32.mrb[0].mxu0
      %v666 = vpop.f32.mrb[0].mxu0
      %v667 = vadd.f32 0.0, %v666
      %v668 = vpop.f32.mrb[0].mxu0
      %669 = vmatprep.mubr.bf16.mxu0 0
      %670 = vmatmul.mubr.bf16.gmra.mrb[0].mxu0 %v577
      %v671 = vpop.f32.mrb[0].mxu0
      %v672 = vadd.f32 0.0, %v671
      %v673 = vpop.f32.mrb[0].mxu0
      %v674 = vpop.f32.mrb[0].mxu0
      %v675 = vadd.f32 0.0, %v674
      %v676 = vpop.f32.mrb[0].mxu0
      %677 = vmatprep.mubr.bf16.mxu0 0
      %678 = vmatmul.mubr.bf16.gmra.mrb[0].mxu0 %v580
      %v679 = vpop.f32.mrb[0].mxu0
      %v680 = vadd.f32 0.0, %v679
      %v681 = vpop.f32.mrb[0].mxu0
      %v682 = vpop.f32.mrb[0].mxu0
      %v683 = vadd.f32 0.0, %v682
      %v684 = vpop.f32.mrb[0].mxu0
      %685 = vmatprep.mubr.bf16.mxu0 0
      %686 = vmatmul.mubr.bf16.gmra.mrb[0].mxu0 %v583
      %v687 = vpop.f32.mrb[0].mxu0
      %v688 = vadd.f32 0.0, %v687
      %v689 = vpop.f32.mrb[0].mxu0
      %v690 = vpop.f32.mrb[0].mxu0
      %v691 = vadd.f32 0.0, %v690
      %v692 = vpop.f32.mrb[0].mxu0
      %693 = vdwg.mxu0
      %v694 = vsel %vm557, %v467, 0
      %v696 = vsel %vm557, %v468, 0
      %v698 = vsel %vm557, %v469, 0
      %v700 = vsel %vm557, %v470, 0
      %v702 = vsel %vm557, %v471, 0
      %v704 = vsel %vm557, %v472, 0
      %v706 = vsel %vm557, %v473, 0
      %v708 = vsel %vm557, %v474, 0
      %v710 = vsel %vm557, %v475, 0
      %v713 = vsel %vm585, %v476, 0
      %715 = vmatprep.subr.bf16.mxu0 0
      %716 = vmatpush1.bf16.msra.mxu0 %v713
      %717 = vmatprep.subr.bf16.mxu0 0
      %718 = vmatpush1.bf16.msra.mxu0 0
      %719 = vmatprep.subr.bf16.mxu0 0
      %720 = vmatpush1.bf16.msra.mxu0 0
      %721 = vmatprep.subr.bf16.mxu0 0
      %722 = vmatpush1.bf16.msra.mxu0 0
      %723 = vmatprep.subr.bf16.mxu0 0
      %724 = vmatpush1.bf16.msra.mxu0 0
      %725 = vmatprep.subr.bf16.mxu0 0
      %726 = vmatpush1.bf16.msra.mxu0 0
      %727 = vmatprep.subr.bf16.mxu0 0
      %728 = vmatpush1.bf16.msra.mxu0 0
      %729 = vmatprep.subr.bf16.mxu0 0
      %730 = vmatpush1.bf16.msra.mxu0 0
      %731 = vmatprep.subr.bf16.mxu0 0
      %732 = vmatpush1.bf16.msra.mxu0 0
      %733 = vmatprep.subr.bf16.mxu0 0
      %734 = vmatpush1.bf16.msra.mxu0 0
      %735 = vmatprep.subr.bf16.mxu0 0
      %736 = vmatpush1.bf16.msra.mxu0 0
      %737 = vmatprep.subr.bf16.mxu0 0
      %738 = vmatpush1.bf16.msra.mxu0 0
      %739 = vmatprep.subr.bf16.mxu0 0
      %740 = vmatpush1.bf16.msra.mxu0 0
      %741 = vmatprep.subr.bf16.mxu0 0
      %742 = vmatpush1.bf16.msra.mxu0 0
      %743 = vmatprep.subr.bf16.mxu0 0
      %744 = vmatpush1.bf16.msra.mxu0 0
      %745 = vmatprep.subr.bf16.mxu0 0
      %746 = vmatpush1.bf16.msra.mxu0 0
      %747 = vmatprep.mubr.bf16.mxu0 0
      %748 = vmatmul.mubr.bf16.gmra.mrb[0].mxu0 %v694
      %v749 = vpop.f32.mrb[0].mxu0
      %v750 = vadd.f32 %v624, %v749
      %v751 = vpop.f32.mrb[0].mxu0
      %v752 = vpop.f32.mrb[0].mxu0
      %v753 = vadd.f32 %v627, %v752
      %v754 = vpop.f32.mrb[0].mxu0
      %755 = vmatprep.mubr.bf16.mxu0 0
      %756 = vmatmul.mubr.bf16.gmra.mrb[0].mxu0 %v696
      %v757 = vpop.f32.mrb[0].mxu0
      %v758 = vadd.f32 %v632, %v757
      %v759 = vpop.f32.mrb[0].mxu0
      %v760 = vpop.f32.mrb[0].mxu0
      %v761 = vadd.f32 %v635, %v760
      %v762 = vpop.f32.mrb[0].mxu0
      %763 = vmatprep.mubr.bf16.mxu0 0
      %764 = vmatmul.mubr.bf16.gmra.mrb[0].mxu0 %v698
      %v765 = vpop.f32.mrb[0].mxu0
      %v766 = vadd.f32 %v640, %v765
      %v767 = vpop.f32.mrb[0].mxu0
      %v768 = vpop.f32.mrb[0].mxu0
      %v769 = vadd.f32 %v643, %v768
      %v770 = vpop.f32.mrb[0].mxu0
      %771 = vmatprep.mubr.bf16.mxu0 0
      %772 = vmatmul.mubr.bf16.gmra.mrb[0].mxu0 %v700
      %v773 = vpop.f32.mrb[0].mxu0
      %v774 = vadd.f32 %v648, %v773
      %v775 = vpop.f32.mrb[0].mxu0
      %v776 = vpop.f32.mrb[0].mxu0
      %v777 = vadd.f32 %v651, %v776
      %v778 = vpop.f32.mrb[0].mxu0
      %779 = vmatprep.mubr.bf16.mxu0 0
      %780 = vmatmul.mubr.bf16.gmra.mrb[0].mxu0 %v702
      %v781 = vpop.f32.mrb[0].mxu0
      %v782 = vadd.f32 %v656, %v781
      %v783 = vpop.f32.mrb[0].mxu0
      %v784 = vpop.f32.mrb[0].mxu0
      %v785 = vadd.f32 %v659, %v784
      %v786 = vpop.f32.mrb[0].mxu0
      %787 = vmatprep.mubr.bf16.mxu0 0
      %788 = vmatmul.mubr.bf16.gmra.mrb[0].mxu0 %v704
      %v789 = vpop.f32.mrb[0].mxu0
      %v790 = vadd.f32 %v664, %v789
      %v791 = vpop.f32.mrb[0].mxu0
      %v792 = vpop.f32.mrb[0].mxu0
      %v793 = vadd.f32 %v667, %v792
      %v794 = vpop.f32.mrb[0].mxu0
      %795 = vmatprep.mubr.bf16.mxu0 0
      %796 = vmatmul.mubr.bf16.gmra.mrb[0].mxu0 %v706
      %v797 = vpop.f32.mrb[0].mxu0
      %v798 = vadd.f32 %v672, %v797
      %v799 = vpop.f32.mrb[0].mxu0
      %v800 = vpop.f32.mrb[0].mxu0
      %v801 = vadd.f32 %v675, %v800
      %v802 = vpop.f32.mrb[0].mxu0
      %803 = vmatprep.mubr.bf16.mxu0 0
      %804 = vmatmul.mubr.bf16.gmra.mrb[0].mxu0 %v708
      %v805 = vpop.f32.mrb[0].mxu0
      %v806 = vadd.f32 %v680, %v805
      %v807 = vpop.f32.mrb[0].mxu0
      %v808 = vpop.f32.mrb[0].mxu0
      %v809 = vadd.f32 %v683, %v808
      %v810 = vpop.f32.mrb[0].mxu0
      %811 = vmatprep.mubr.bf16.mxu0 0
      %812 = vmatmul.mubr.bf16.gmra.mrb[0].mxu0 %v710
      %v813 = vpop.f32.mrb[0].mxu0
      %v814 = vadd.f32 %v688, %v813
      %v815 = vpop.f32.mrb[0].mxu0
      %v816 = vpop.f32.mrb[0].mxu0
      %v817 = vadd.f32 %v691, %v816
      %v818 = vpop.f32.mrb[0].mxu0
      %819 = vdwg.mxu0
      %s820 = scalar_lea.vmem %s2, 4
      %v821 = vld [vmem:[%s820] sm:$0x3]
      %vm832 = vcmask 1046528
      %v833 = vrot.slane %v467, 1
      %v834 = vrot.slane %v468, 1
      %v835 = vsel %vm832, %v833, %v834
      %v836 = vrot.slane %v469, 1
      %v837 = vsel %vm832, %v834, %v836
      %v838 = vrot.slane %v470, 1
      %v839 = vsel %vm832, %v836, %v838
      %v840 = vrot.slane %v471, 1
      %v841 = vsel %vm832, %v838, %v840
      %v842 = vrot.slane %v472, 1
      %v843 = vsel %vm832, %v840, %v842
      %v844 = vrot.slane %v473, 1
      %v845 = vsel %vm832, %v842, %v844
      %v846 = vrot.slane %v474, 1
      %v847 = vsel %vm832, %v844, %v846
      %v848 = vrot.slane %v475, 1
      %v849 = vsel %vm832, %v846, %v848
      %v850 = vrot.slane %v477, 1
      %v851 = vsel %vm832, %v848, %v850
      %v853 = vsel %vm557, %v835, 0
      %v856 = vsel %vm557, %v837, 0
      %v859 = vsel %vm557, %v839, 0
      %v862 = vsel %vm557, %v841, 0
      %v865 = vsel %vm557, %v843, 0
      %v868 = vsel %vm557, %v845, 0
      %v871 = vsel %vm557, %v847, 0
      %v874 = vsel %vm557, %v849, 0
      %v877 = vsel %vm557, %v851, 0
      %v880 = vsel %vm585, %v821, 0
      %882 = vmatprep.subr.bf16.mxu0 0
      %883 = vmatpush1.bf16.msra.mxu0 %v880
      %884 = vmatprep.subr.bf16.mxu0 0
      %885 = vmatpush1.bf16.msra.mxu0 0
      %886 = vmatprep.subr.bf16.mxu0 0
      %887 = vmatpush1.bf16.msra.mxu0 0
      %888 = vmatprep.subr.bf16.mxu0 0
      %889 = vmatpush1.bf16.msra.mxu0 0
      %890 = vmatprep.subr.bf16.mxu0 0
      %891 = vmatpush1.bf16.msra.mxu0 0
      %892 = vmatprep.subr.bf16.mxu0 0
      %893 = vmatpush1.bf16.msra.mxu0 0
      %894 = vmatprep.subr.bf16.mxu0 0
      %895 = vmatpush1.bf16.msra.mxu0 0
      %896 = vmatprep.subr.bf16.mxu0 0
      %897 = vmatpush1.bf16.msra.mxu0 0
      %898 = vmatprep.subr.bf16.mxu0 0
      %899 = vmatpush1.bf16.msra.mxu0 0
      %900 = vmatprep.subr.bf16.mxu0 0
      %901 = vmatpush1.bf16.msra.mxu0 0
      %902 = vmatprep.subr.bf16.mxu0 0
      %903 = vmatpush1.bf16.msra.mxu0 0
      %904 = vmatprep.subr.bf16.mxu0 0
      %905 = vmatpush1.bf16.msra.mxu0 0
      %906 = vmatprep.subr.bf16.mxu0 0
      %907 = vmatpush1.bf16.msra.mxu0 0
      %908 = vmatprep.subr.bf16.mxu0 0
      %909 = vmatpush1.bf16.msra.mxu0 0
      %910 = vmatprep.subr.bf16.mxu0 0
      %911 = vmatpush1.bf16.msra.mxu0 0
      %912 = vmatprep.subr.bf16.mxu0 0
      %913 = vmatpush1.bf16.msra.mxu0 0
      %914 = vmatprep.mubr.bf16.mxu0 0
      %915 = vmatmul.mubr.bf16.gmra.mrb[0].mxu0 %v853
      %v916 = vpop.f32.mrb[0].mxu0
      %v917 = vadd.f32 0.0, %v916
      %v918 = vpop.f32.mrb[0].mxu0
      %v919 = vpop.f32.mrb[0].mxu0
      %v920 = vadd.f32 0.0, %v919
      %v921 = vpop.f32.mrb[0].mxu0
      %922 = vmatprep.mubr.bf16.mxu0 0
      %923 = vmatmul.mubr.bf16.gmra.mrb[0].mxu0 %v856
      %v924 = vpop.f32.mrb[0].mxu0
      %v925 = vadd.f32 0.0, %v924
      %v926 = vpop.f32.mrb[0].mxu0
      %v927 = vpop.f32.mrb[0].mxu0
      %v928 = vadd.f32 0.0, %v927
      %v929 = vpop.f32.mrb[0].mxu0
      %930 = vmatprep.mubr.bf16.mxu0 0
      %931 = vmatmul.mubr.bf16.gmra.mrb[0].mxu0 %v859
      %v932 = vpop.f32.mrb[0].mxu0
      %v933 = vadd.f32 0.0, %v932
      %v934 = vpop.f32.mrb[0].mxu0
      %v935 = vpop.f32.mrb[0].mxu0
      %v936 = vadd.f32 0.0, %v935
      %v937 = vpop.f32.mrb[0].mxu0
      %938 = vmatprep.mubr.bf16.mxu0 0
      %939 = vmatmul.mubr.bf16.gmra.mrb[0].mxu0 %v862
      %v940 = vpop.f32.mrb[0].mxu0
      %v941 = vadd.f32 0.0, %v940
      %v942 = vpop.f32.mrb[0].mxu0
      %v943 = vpop.f32.mrb[0].mxu0
      %v944 = vadd.f32 0.0, %v943
      %v945 = vpop.f32.mrb[0].mxu0
      %946 = vmatprep.mubr.bf16.mxu0 0
      %947 = vmatmul.mubr.bf16.gmra.mrb[0].mxu0 %v865
      %v948 = vpop.f32.mrb[0].mxu0
      %v949 = vadd.f32 0.0, %v948
      %v950 = vpop.f32.mrb[0].mxu0
      %v951 = vpop.f32.mrb[0].mxu0
      %v952 = vadd.f32 0.0, %v951
      %v953 = vpop.f32.mrb[0].mxu0
      %954 = vmatprep.mubr.bf16.mxu0 0
      %955 = vmatmul.mubr.bf16.gmra.mrb[0].mxu0 %v868
      %v956 = vpop.f32.mrb[0].mxu0
      %v957 = vadd.f32 0.0, %v956
      %v958 = vpop.f32.mrb[0].mxu0
      %v959 = vpop.f32.mrb[0].mxu0
      %v960 = vadd.f32 0.0, %v959
      %v961 = vpop.f32.mrb[0].mxu0
      %962 = vmatprep.mubr.bf16.mxu0 0
      %963 = vmatmul.mubr.bf16.gmra.mrb[0].mxu0 %v871
      %v964 = vpop.f32.mrb[0].mxu0
      %v965 = vadd.f32 0.0, %v964
      %v966 = vpop.f32.mrb[0].mxu0
      %v967 = vpop.f32.mrb[0].mxu0
      %v968 = vadd.f32 0.0, %v967
      %v969 = vpop.f32.mrb[0].mxu0
      %970 = vmatprep.mubr.bf16.mxu0 0
      %971 = vmatmul.mubr.bf16.gmra.mrb[0].mxu0 %v874
      %v972 = vpop.f32.mrb[0].mxu0
      %v973 = vadd.f32 0.0, %v972
      %v974 = vpop.f32.mrb[0].mxu0
      %v975 = vpop.f32.mrb[0].mxu0
      %v976 = vadd.f32 0.0, %v975
      %v977 = vpop.f32.mrb[0].mxu0
      %978 = vmatprep.mubr.bf16.mxu0 0
      %979 = vmatmul.mubr.bf16.gmra.mrb[0].mxu0 %v877
      %v980 = vpop.f32.mrb[0].mxu0
      %v981 = vadd.f32 0.0, %v980
      %v982 = vpop.f32.mrb[0].mxu0
      %v983 = vpop.f32.mrb[0].mxu0
      %v984 = vadd.f32 0.0, %v983
      %v985 = vpop.f32.mrb[0].mxu0
      %986 = vdwg.mxu0
      %v987 = vadd.f32 %v750, %v917
      %v988 = vadd.f32 %v753, %v920
      %v989 = vadd.f32 %v758, %v925
      %v990 = vadd.f32 %v761, %v928
      %v991 = vadd.f32 %v766, %v933
      %v992 = vadd.f32 %v769, %v936
      %v993 = vadd.f32 %v774, %v941
      %v994 = vadd.f32 %v777, %v944
      %v995 = vadd.f32 %v782, %v949
      %v996 = vadd.f32 %v785, %v952
      %v997 = vadd.f32 %v790, %v957
      %v998 = vadd.f32 %v793, %v960
      %v999 = vadd.f32 %v798, %v965
      %v1000 = vadd.f32 %v801, %v968
      %v1001 = vadd.f32 %v806, %v973
      %v1002 = vadd.f32 %v809, %v976
      %v1003 = vadd.f32 %v814, %v981
      %v1004 = vadd.f32 %v817, %v984
      %v1005 = vpack.c.bf16 %v463, %v462
      %v1006 = vpack.c.bf16 %v464, %v464
      %s1007 = scalar_lea.vmem %s2, 6
      %v1008 = vld [vmem:[%s1007] sm:$0x3]
      %v1011 = vrot.slane %v1005, 1
      %v1012 = vsel %vm832, %v848, %v1011
      %v1013 = vrot.slane %v1006, 1
      %v1014 = vsel %vm832, %v1011, %v1013
      %v1016 = vsel %vm557, %v1012, 0
      %v1019 = vsel %vm557, %v1014, 0
      %v1022 = vsel %vm585, %v1008, 0
      %1024 = vmatprep.subr.bf16.mxu0 0
      %1025 = vmatpush1.bf16.msra.mxu0 %v1022
      %1026 = vmatprep.subr.bf16.mxu0 0
      %1027 = vmatpush1.bf16.msra.mxu0 0
      %1028 = vmatprep.subr.bf16.mxu0 0
      %1029 = vmatpush1.bf16.msra.mxu0 0
      %1030 = vmatprep.subr.bf16.mxu0 0
      %1031 = vmatpush1.bf16.msra.mxu0 0
      %1032 = vmatprep.subr.bf16.mxu0 0
      %1033 = vmatpush1.bf16.msra.mxu0 0
      %1034 = vmatprep.subr.bf16.mxu0 0
      %1035 = vmatpush1.bf16.msra.mxu0 0
      %1036 = vmatprep.subr.bf16.mxu0 0
      %1037 = vmatpush1.bf16.msra.mxu0 0
      %1038 = vmatprep.subr.bf16.mxu0 0
      %1039 = vmatpush1.bf16.msra.mxu0 0
      %1040 = vmatprep.subr.bf16.mxu0 0
      %1041 = vmatpush1.bf16.msra.mxu0 0
      %1042 = vmatprep.subr.bf16.mxu0 0
      %1043 = vmatpush1.bf16.msra.mxu0 0
      %1044 = vmatprep.subr.bf16.mxu0 0
      %1045 = vmatpush1.bf16.msra.mxu0 0
      %1046 = vmatprep.subr.bf16.mxu0 0
      %1047 = vmatpush1.bf16.msra.mxu0 0
      %1048 = vmatprep.subr.bf16.mxu0 0
      %1049 = vmatpush1.bf16.msra.mxu0 0
      %1050 = vmatprep.subr.bf16.mxu0 0
      %1051 = vmatpush1.bf16.msra.mxu0 0
      %1052 = vmatprep.subr.bf16.mxu0 0
      %1053 = vmatpush1.bf16.msra.mxu0 0
      %1054 = vmatprep.subr.bf16.mxu0 0
      %1055 = vmatpush1.bf16.msra.mxu0 0
      %1056 = vmatprep.mubr.bf16.mxu0 0
      %1057 = vmatmul.mubr.bf16.gmra.mrb[0].mxu0 %v856
      %v1058 = vpop.f32.mrb[0].mxu0
      %v1059 = vadd.f32 0.0, %v1058
      %v1060 = vpop.f32.mrb[0].mxu0
      %v1061 = vpop.f32.mrb[0].mxu0
      %v1062 = vadd.f32 0.0, %v1061
      %v1063 = vpop.f32.mrb[0].mxu0
      %1064 = vmatprep.mubr.bf16.mxu0 0
      %1065 = vmatmul.mubr.bf16.gmra.mrb[0].mxu0 %v859
      %v1066 = vpop.f32.mrb[0].mxu0
      %v1067 = vadd.f32 0.0, %v1066
      %v1068 = vpop.f32.mrb[0].mxu0
      %v1069 = vpop.f32.mrb[0].mxu0
      %v1070 = vadd.f32 0.0, %v1069
      %v1071 = vpop.f32.mrb[0].mxu0
      %1072 = vmatprep.mubr.bf16.mxu0 0
      %1073 = vmatmul.mubr.bf16.gmra.mrb[0].mxu0 %v862
      %v1074 = vpop.f32.mrb[0].mxu0
      %v1075 = vadd.f32 0.0, %v1074
      %v1076 = vpop.f32.mrb[0].mxu0
      %v1077 = vpop.f32.mrb[0].mxu0
      %v1078 = vadd.f32 0.0, %v1077
      %v1079 = vpop.f32.mrb[0].mxu0
      %1080 = vmatprep.mubr.bf16.mxu0 0
      %1081 = vmatmul.mubr.bf16.gmra.mrb[0].mxu0 %v865
      %v1082 = vpop.f32.mrb[0].mxu0
      %v1083 = vadd.f32 0.0, %v1082
      %v1084 = vpop.f32.mrb[0].mxu0
      %v1085 = vpop.f32.mrb[0].mxu0
      %v1086 = vadd.f32 0.0, %v1085
      %v1087 = vpop.f32.mrb[0].mxu0
      %1088 = vmatprep.mubr.bf16.mxu0 0
      %1089 = vmatmul.mubr.bf16.gmra.mrb[0].mxu0 %v868
      %v1090 = vpop.f32.mrb[0].mxu0
      %v1091 = vadd.f32 0.0, %v1090
      %v1092 = vpop.f32.mrb[0].mxu0
      %v1093 = vpop.f32.mrb[0].mxu0
      %v1094 = vadd.f32 0.0, %v1093
      %v1095 = vpop.f32.mrb[0].mxu0
      %1096 = vmatprep.mubr.bf16.mxu0 0
      %1097 = vmatmul.mubr.bf16.gmra.mrb[0].mxu0 %v871
      %v1098 = vpop.f32.mrb[0].mxu0
      %v1099 = vadd.f32 0.0, %v1098
      %v1100 = vpop.f32.mrb[0].mxu0
      %v1101 = vpop.f32.mrb[0].mxu0
      %v1102 = vadd.f32 0.0, %v1101
      %v1103 = vpop.f32.mrb[0].mxu0
      %1104 = vmatprep.mubr.bf16.mxu0 0
      %1105 = vmatmul.mubr.bf16.gmra.mrb[0].mxu0 %v874
      %v1106 = vpop.f32.mrb[0].mxu0
      %v1107 = vadd.f32 0.0, %v1106
      %v1108 = vpop.f32.mrb[0].mxu0
      %v1109 = vpop.f32.mrb[0].mxu0
      %v1110 = vadd.f32 0.0, %v1109
      %v1111 = vpop.f32.mrb[0].mxu0
      %1112 = vmatprep.mubr.bf16.mxu0 0
      %1113 = vmatmul.mubr.bf16.gmra.mrb[0].mxu0 %v1016
      %v1114 = vpop.f32.mrb[0].mxu0
      %v1115 = vadd.f32 0.0, %v1114
      %v1116 = vpop.f32.mrb[0].mxu0
      %v1117 = vpop.f32.mrb[0].mxu0
      %v1118 = vadd.f32 0.0, %v1117
      %v1119 = vpop.f32.mrb[0].mxu0
      %1120 = vmatprep.mubr.bf16.mxu0 0
      %1121 = vmatmul.mubr.bf16.gmra.mrb[0].mxu0 %v1019
      %v1122 = vpop.f32.mrb[0].mxu0
      %v1123 = vadd.f32 0.0, %v1122
      %v1124 = vpop.f32.mrb[0].mxu0
      %v1125 = vpop.f32.mrb[0].mxu0
      %v1126 = vadd.f32 0.0, %v1125
      %v1127 = vpop.f32.mrb[0].mxu0
      %1128 = vdwg.mxu0
      %v1129 = vadd.f32 %v987, %v1059
      %v1130 = vadd.f32 %v988, %v1062
      %v1131 = vadd.f32 %v989, %v1067
      %v1132 = vadd.f32 %v990, %v1070
      %v1133 = vadd.f32 %v991, %v1075
      %v1134 = vadd.f32 %v992, %v1078
      %v1135 = vadd.f32 %v993, %v1083
      %v1136 = vadd.f32 %v994, %v1086
      %v1137 = vadd.f32 %v995, %v1091
      %v1138 = vadd.f32 %v996, %v1094
      %v1139 = vadd.f32 %v997, %v1099
      %v1140 = vadd.f32 %v998, %v1102
      %v1141 = vadd.f32 %v999, %v1107
      %v1142 = vadd.f32 %v1000, %v1110
      %v1143 = vadd.f32 %v1001, %v1115
      %v1144 = vadd.f32 %v1002, %v1118
      %v1145 = vadd.f32 %v1003, %v1123
      %v1146 = vadd.f32 %v1004, %v1126
      %s1147 = scalar_lea.vmem %s2, 8
      %v1148 = vld [vmem:[%s1147] sm:$0x3]
      %vm1149 = vsmask.f32 6400
      %v1150 = vrot.slane %v493, 1
      %v1151 = vrot.slane %v489, 2
      %v1152 = vor.u32 %v1150, %v1151
      %v1153 = vrot.slane %v501, 1
      %v1154 = vrot.slane %v497, 2
      %v1155 = vor.u32 %v1153, %v1154
      %v1156 = vsel %vm1149, %v1152, %v1155
      %v1157 = vrot.slane %v509, 1
      %v1158 = vrot.slane %v505, 2
      %v1159 = vor.u32 %v1157, %v1158
      %v1160 = vsel %vm1149, %v1155, %v1159
      %v1161 = vrot.slane %v517, 1
      %v1162 = vrot.slane %v513, 2
      %v1163 = vor.u32 %v1161, %v1162
      %v1164 = vsel %vm1149, %v1159, %v1163
      %v1165 = vrot.slane %v525, 1
      %v1166 = vrot.slane %v521, 2
      %v1167 = vor.u32 %v1165, %v1166
      %v1168 = vsel %vm1149, %v1163, %v1167
      %v1169 = vrot.slane %v533, 1
      %v1170 = vrot.slane %v529, 2
      %v1171 = vor.u32 %v1169, %v1170
      %v1172 = vsel %vm1149, %v1167, %v1171
      %v1173 = vrot.slane %v541, 1
      %v1174 = vrot.slane %v537, 2
      %v1175 = vor.u32 %v1173, %v1174
      %v1176 = vsel %vm1149, %v1171, %v1175
      %v1177 = vrot.slane %v549, 1
      %v1178 = vrot.slane %v545, 2
      %v1179 = vor.u32 %v1177, %v1178
      %v1180 = vsel %vm1149, %v1175, %v1179
      %v1182 = vshrl.u32 %v1005, 16
      %v1184 = vrot.slane %v1182, 1
      %v1185 = vshll.u32 %v1005, 16
      %v1187 = vrot.slane %v1185, 2
      %v1188 = vor.u32 %v1184, %v1187
      %v1189 = vsel %vm1149, %v1179, %v1188
      %v1191 = vshrl.u32 %v1006, 16
      %v1193 = vrot.slane %v1191, 1
      %v1194 = vshll.u32 %v1006, 16
      %v1196 = vrot.slane %v1194, 2
      %v1197 = vor.u32 %v1193, %v1196
      %v1198 = vsel %vm1149, %v1188, %v1197
      %v1200 = vsel %vm557, %v1156, 0
      %v1203 = vsel %vm557, %v1160, 0
      %v1206 = vsel %vm557, %v1164, 0
      %v1209 = vsel %vm557, %v1168, 0
      %v1212 = vsel %vm557, %v1172, 0
      %v1215 = vsel %vm557, %v1176, 0
      %v1218 = vsel %vm557, %v1180, 0
      %v1221 = vsel %vm557, %v1189, 0
      %v1224 = vsel %vm557, %v1198, 0
      %v1227 = vsel %vm585, %v1148, 0
      %1229 = vmatprep.subr.bf16.mxu0 0
      %1230 = vmatpush1.bf16.msra.mxu0 %v1227
      %1231 = vmatprep.subr.bf16.mxu0 0
      %1232 = vmatpush1.bf16.msra.mxu0 0
      %1233 = vmatprep.subr.bf16.mxu0 0
      %1234 = vmatpush1.bf16.msra.mxu0 0
      %1235 = vmatprep.subr.bf16.mxu0 0
      %1236 = vmatpush1.bf16.msra.mxu0 0
      %1237 = vmatprep.subr.bf16.mxu0 0
      %1238 = vmatpush1.bf16.msra.mxu0 0
      %1239 = vmatprep.subr.bf16.mxu0 0
      %1240 = vmatpush1.bf16.msra.mxu0 0
      %1241 = vmatprep.subr.bf16.mxu0 0
      %1242 = vmatpush1.bf16.msra.mxu0 0
      %1243 = vmatprep.subr.bf16.mxu0 0
      %1244 = vmatpush1.bf16.msra.mxu0 0
      %1245 = vmatprep.subr.bf16.mxu0 0
      %1246 = vmatpush1.bf16.msra.mxu0 0
      %1247 = vmatprep.subr.bf16.mxu0 0
      %1248 = vmatpush1.bf16.msra.mxu0 0
      %1249 = vmatprep.subr.bf16.mxu0 0
      %1250 = vmatpush1.bf16.msra.mxu0 0
      %1251 = vmatprep.subr.bf16.mxu0 0
      %1252 = vmatpush1.bf16.msra.mxu0 0
      %1253 = vmatprep.subr.bf16.mxu0 0
      %1254 = vmatpush1.bf16.msra.mxu0 0
      %1255 = vmatprep.subr.bf16.mxu0 0
      %1256 = vmatpush1.bf16.msra.mxu0 0
      %1257 = vmatprep.subr.bf16.mxu0 0
      %1258 = vmatpush1.bf16.msra.mxu0 0
      %1259 = vmatprep.subr.bf16.mxu0 0
      %1260 = vmatpush1.bf16.msra.mxu0 0
      %1261 = vmatprep.mubr.bf16.mxu0 0
      %1262 = vmatmul.mubr.bf16.gmra.mrb[0].mxu0 %v1200
      %v1263 = vpop.f32.mrb[0].mxu0
      %v1264 = vadd.f32 0.0, %v1263
      %v1265 = vpop.f32.mrb[0].mxu0
      %v1266 = vpop.f32.mrb[0].mxu0
      %v1267 = vadd.f32 0.0, %v1266
      %v1268 = vpop.f32.mrb[0].mxu0
      %1269 = vmatprep.mubr.bf16.mxu0 0
      %1270 = vmatmul.mubr.bf16.gmra.mrb[0].mxu0 %v1203
      %v1271 = vpop.f32.mrb[0].mxu0
      %v1272 = vadd.f32 0.0, %v1271
      %v1273 = vpop.f32.mrb[0].mxu0
      %v1274 = vpop.f32.mrb[0].mxu0
      %v1275 = vadd.f32 0.0, %v1274
      %v1276 = vpop.f32.mrb[0].mxu0
      %1277 = vmatprep.mubr.bf16.mxu0 0
      %1278 = vmatmul.mubr.bf16.gmra.mrb[0].mxu0 %v1206
      %v1279 = vpop.f32.mrb[0].mxu0
      %v1280 = vadd.f32 0.0, %v1279
      %v1281 = vpop.f32.mrb[0].mxu0
      %v1282 = vpop.f32.mrb[0].mxu0
      %v1283 = vadd.f32 0.0, %v1282
      %v1284 = vpop.f32.mrb[0].mxu0
      %1285 = vmatprep.mubr.bf16.mxu0 0
      %1286 = vmatmul.mubr.bf16.gmra.mrb[0].mxu0 %v1209
      %v1287 = vpop.f32.mrb[0].mxu0
      %v1288 = vadd.f32 0.0, %v1287
      %v1289 = vpop.f32.mrb[0].mxu0
      %v1290 = vpop.f32.mrb[0].mxu0
      %v1291 = vadd.f32 0.0, %v1290
      %v1292 = vpop.f32.mrb[0].mxu0
      %1293 = vmatprep.mubr.bf16.mxu0 0
      %1294 = vmatmul.mubr.bf16.gmra.mrb[0].mxu0 %v1212
      %v1295 = vpop.f32.mrb[0].mxu0
      %v1296 = vadd.f32 0.0, %v1295
      %v1297 = vpop.f32.mrb[0].mxu0
      %v1298 = vpop.f32.mrb[0].mxu0
      %v1299 = vadd.f32 0.0, %v1298
      %v1300 = vpop.f32.mrb[0].mxu0
      %1301 = vmatprep.mubr.bf16.mxu0 0
      %1302 = vmatmul.mubr.bf16.gmra.mrb[0].mxu0 %v1215
      %v1303 = vpop.f32.mrb[0].mxu0
      %v1304 = vadd.f32 0.0, %v1303
      %v1305 = vpop.f32.mrb[0].mxu0
      %v1306 = vpop.f32.mrb[0].mxu0
      %v1307 = vadd.f32 0.0, %v1306
      %v1308 = vpop.f32.mrb[0].mxu0
      %1309 = vmatprep.mubr.bf16.mxu0 0
      %1310 = vmatmul.mubr.bf16.gmra.mrb[0].mxu0 %v1218
      %v1311 = vpop.f32.mrb[0].mxu0
      %v1312 = vadd.f32 0.0, %v1311
      %v1313 = vpop.f32.mrb[0].mxu0
      %v1314 = vpop.f32.mrb[0].mxu0
      %v1315 = vadd.f32 0.0, %v1314
      %v1316 = vpop.f32.mrb[0].mxu0
      %1317 = vmatprep.mubr.bf16.mxu0 0
      %1318 = vmatmul.mubr.bf16.gmra.mrb[0].mxu0 %v1221
      %v1319 = vpop.f32.mrb[0].mxu0
      %v1320 = vadd.f32 0.0, %v1319
      %v1321 = vpop.f32.mrb[0].mxu0
      %v1322 = vpop.f32.mrb[0].mxu0
      %v1323 = vadd.f32 0.0, %v1322
      %v1324 = vpop.f32.mrb[0].mxu0
      %1325 = vmatprep.mubr.bf16.mxu0 0
      %1326 = vmatmul.mubr.bf16.gmra.mrb[0].mxu0 %v1224
      %v1327 = vpop.f32.mrb[0].mxu0
      %v1328 = vadd.f32 0.0, %v1327
      %v1329 = vpop.f32.mrb[0].mxu0
      %v1330 = vpop.f32.mrb[0].mxu0
      %v1331 = vadd.f32 0.0, %v1330
      %v1332 = vpop.f32.mrb[0].mxu0
      %1333 = vdwg.mxu0
      %v1334 = vadd.f32 %v1129, %v1264
      %v1335 = vadd.f32 %v1130, %v1267
      %v1336 = vadd.f32 %v1131, %v1272
      %v1337 = vadd.f32 %v1132, %v1275
      %v1338 = vadd.f32 %v1133, %v1280
      %v1339 = vadd.f32 %v1134, %v1283
      %v1340 = vadd.f32 %v1135, %v1288
      %v1341 = vadd.f32 %v1136, %v1291
      %v1342 = vadd.f32 %v1137, %v1296
      %v1343 = vadd.f32 %v1138, %v1299
      %v1344 = vadd.f32 %v1139, %v1304
      %v1345 = vadd.f32 %v1140, %v1307
      %v1346 = vadd.f32 %v1141, %v1312
      %v1347 = vadd.f32 %v1142, %v1315
      %v1348 = vadd.f32 %v1143, %v1320
      %v1349 = vadd.f32 %v1144, %v1323
      %v1350 = vadd.f32 %v1145, %v1328
      %v1351 = vadd.f32 %v1146, %v1331
      %s1352 = scalar_lea.vmem %s2, 10
      %v1353 = vld [vmem:[%s1352] sm:$0x3]
      %vm1354 = vcmask 1045504
      %v1355 = vrot.slane %v468, 2
      %v1356 = vrot.slane %v469, 2
      %v1357 = vsel %vm1354, %v1355, %v1356
      %v1358 = vrot.slane %v470, 2
      %v1359 = vsel %vm1354, %v1356, %v1358
      %v1360 = vrot.slane %v471, 2
      %v1361 = vsel %vm1354, %v1358, %v1360
      %v1362 = vrot.slane %v472, 2
      %v1363 = vsel %vm1354, %v1360, %v1362
      %v1364 = vrot.slane %v473, 2
      %v1365 = vsel %vm1354, %v1362, %v1364
      %v1366 = vrot.slane %v474, 2
      %v1367 = vsel %vm1354, %v1364, %v1366
      %v1368 = vrot.slane %v475, 2
      %v1369 = vsel %vm1354, %v1366, %v1368
      %v1370 = vrot.slane %v1005, 2
      %v1371 = vsel %vm1354, %v1368, %v1370
      %v1372 = vrot.slane %v1006, 2
      %v1373 = vsel %vm1354, %v1370, %v1372
      %v1375 = vsel %vm557, %v1357, 0
      %v1378 = vsel %vm557, %v1359, 0
      %v1381 = vsel %vm557, %v1361, 0
      %v1384 = vsel %vm557, %v1363, 0
      %v1387 = vsel %vm557, %v1365, 0
      %v1390 = vsel %vm557, %v1367, 0
      %v1393 = vsel %vm557, %v1369, 0
      %v1396 = vsel %vm557, %v1371, 0
      %v1399 = vsel %vm557, %v1373, 0
      %v1402 = vsel %vm585, %v1353, 0
      %1404 = vmatprep.subr.bf16.mxu0 0
      %1405 = vmatpush1.bf16.msra.mxu0 %v1402
      %1406 = vmatprep.subr.bf16.mxu0 0
      %1407 = vmatpush1.bf16.msra.mxu0 0
      %1408 = vmatprep.subr.bf16.mxu0 0
      %1409 = vmatpush1.bf16.msra.mxu0 0
      %1410 = vmatprep.subr.bf16.mxu0 0
      %1411 = vmatpush1.bf16.msra.mxu0 0
      %1412 = vmatprep.subr.bf16.mxu0 0
      %1413 = vmatpush1.bf16.msra.mxu0 0
      %1414 = vmatprep.subr.bf16.mxu0 0
      %1415 = vmatpush1.bf16.msra.mxu0 0
      %1416 = vmatprep.subr.bf16.mxu0 0
      %1417 = vmatpush1.bf16.msra.mxu0 0
      %1418 = vmatprep.subr.bf16.mxu0 0
      %1419 = vmatpush1.bf16.msra.mxu0 0
      %1420 = vmatprep.subr.bf16.mxu0 0
      %1421 = vmatpush1.bf16.msra.mxu0 0
      %1422 = vmatprep.subr.bf16.mxu0 0
      %1423 = vmatpush1.bf16.msra.mxu0 0
      %1424 = vmatprep.subr.bf16.mxu0 0
      %1425 = vmatpush1.bf16.msra.mxu0 0
      %1426 = vmatprep.subr.bf16.mxu0 0
      %1427 = vmatpush1.bf16.msra.mxu0 0
      %1428 = vmatprep.subr.bf16.mxu0 0
      %1429 = vmatpush1.bf16.msra.mxu0 0
      %1430 = vmatprep.subr.bf16.mxu0 0
      %1431 = vmatpush1.bf16.msra.mxu0 0
      %1432 = vmatprep.subr.bf16.mxu0 0
      %1433 = vmatpush1.bf16.msra.mxu0 0
      %1434 = vmatprep.subr.bf16.mxu0 0
      %1435 = vmatpush1.bf16.msra.mxu0 0
      %1436 = vmatprep.mubr.bf16.mxu0 0
      %1437 = vmatmul.mubr.bf16.gmra.mrb[0].mxu0 %v1375
      %v1438 = vpop.f32.mrb[0].mxu0
      %v1439 = vadd.f32 0.0, %v1438
      %v1440 = vpop.f32.mrb[0].mxu0
      %v1441 = vpop.f32.mrb[0].mxu0
      %v1442 = vadd.f32 0.0, %v1441
      %v1443 = vpop.f32.mrb[0].mxu0
      %1444 = vmatprep.mubr.bf16.mxu0 0
      %1445 = vmatmul.mubr.bf16.gmra.mrb[0].mxu0 %v1378
      %v1446 = vpop.f32.mrb[0].mxu0
      %v1447 = vadd.f32 0.0, %v1446
      %v1448 = vpop.f32.mrb[0].mxu0
      %v1449 = vpop.f32.mrb[0].mxu0
      %v1450 = vadd.f32 0.0, %v1449
      %v1451 = vpop.f32.mrb[0].mxu0
      %1452 = vmatprep.mubr.bf16.mxu0 0
      %1453 = vmatmul.mubr.bf16.gmra.mrb[0].mxu0 %v1381
      %v1454 = vpop.f32.mrb[0].mxu0
      %v1455 = vadd.f32 0.0, %v1454
      %v1456 = vpop.f32.mrb[0].mxu0
      %v1457 = vpop.f32.mrb[0].mxu0
      %v1458 = vadd.f32 0.0, %v1457
      %v1459 = vpop.f32.mrb[0].mxu0
      %1460 = vmatprep.mubr.bf16.mxu0 0
      %1461 = vmatmul.mubr.bf16.gmra.mrb[0].mxu0 %v1384
      %v1462 = vpop.f32.mrb[0].mxu0
      %v1463 = vadd.f32 0.0, %v1462
      %v1464 = vpop.f32.mrb[0].mxu0
      %v1465 = vpop.f32.mrb[0].mxu0
      %v1466 = vadd.f32 0.0, %v1465
      %v1467 = vpop.f32.mrb[0].mxu0
      %1468 = vmatprep.mubr.bf16.mxu0 0
      %1469 = vmatmul.mubr.bf16.gmra.mrb[0].mxu0 %v1387
      %v1470 = vpop.f32.mrb[0].mxu0
      %v1471 = vadd.f32 0.0, %v1470
      %v1472 = vpop.f32.mrb[0].mxu0
      %v1473 = vpop.f32.mrb[0].mxu0
      %v1474 = vadd.f32 0.0, %v1473
      %v1475 = vpop.f32.mrb[0].mxu0
      %1476 = vmatprep.mubr.bf16.mxu0 0
      %1477 = vmatmul.mubr.bf16.gmra.mrb[0].mxu0 %v1390
      %v1478 = vpop.f32.mrb[0].mxu0
      %v1479 = vadd.f32 0.0, %v1478
      %v1480 = vpop.f32.mrb[0].mxu0
      %v1481 = vpop.f32.mrb[0].mxu0
      %v1482 = vadd.f32 0.0, %v1481
      %v1483 = vpop.f32.mrb[0].mxu0
      %1484 = vmatprep.mubr.bf16.mxu0 0
      %1485 = vmatmul.mubr.bf16.gmra.mrb[0].mxu0 %v1393
      %v1486 = vpop.f32.mrb[0].mxu0
      %v1487 = vadd.f32 0.0, %v1486
      %v1488 = vpop.f32.mrb[0].mxu0
      %v1489 = vpop.f32.mrb[0].mxu0
      %v1490 = vadd.f32 0.0, %v1489
      %v1491 = vpop.f32.mrb[0].mxu0
      %1492 = vmatprep.mubr.bf16.mxu0 0
      %1493 = vmatmul.mubr.bf16.gmra.mrb[0].mxu0 %v1396
      %v1494 = vpop.f32.mrb[0].mxu0
      %v1495 = vadd.f32 0.0, %v1494
      %v1496 = vpop.f32.mrb[0].mxu0
      %v1497 = vpop.f32.mrb[0].mxu0
      %v1498 = vadd.f32 0.0, %v1497
      %v1499 = vpop.f32.mrb[0].mxu0
      %1500 = vmatprep.mubr.bf16.mxu0 0
      %1501 = vmatmul.mubr.bf16.gmra.mrb[0].mxu0 %v1399
      %v1502 = vpop.f32.mrb[0].mxu0
      %v1503 = vadd.f32 0.0, %v1502
      %v1504 = vpop.f32.mrb[0].mxu0
      %v1505 = vpop.f32.mrb[0].mxu0
      %v1506 = vadd.f32 0.0, %v1505
      %v1507 = vpop.f32.mrb[0].mxu0
      %1508 = vdwg.mxu0
      %v1509 = vadd.f32 %v1334, %v1439
      %v1510 = vadd.f32 %v1335, %v1442
      %v1511 = vadd.f32 %v1336, %v1447
      %v1512 = vadd.f32 %v1337, %v1450
      %v1513 = vadd.f32 %v1338, %v1455
      %v1514 = vadd.f32 %v1339, %v1458
      %v1515 = vadd.f32 %v1340, %v1463
      %v1516 = vadd.f32 %v1341, %v1466
      %v1517 = vadd.f32 %v1342, %v1471
      %v1518 = vadd.f32 %v1343, %v1474
      %v1519 = vadd.f32 %v1344, %v1479
      %v1520 = vadd.f32 %v1345, %v1482
      %v1521 = vadd.f32 %v1346, %v1487
      %v1522 = vadd.f32 %v1347, %v1490
      %v1523 = vadd.f32 %v1348, %v1495
      %v1524 = vadd.f32 %v1349, %v1498
      %v1525 = vadd.f32 %v1350, %v1503
      %v1526 = vadd.f32 %v1351, %v1506
      %v1527 = vpack.c.bf16 %v465, %v464
      %v1528 = vpack.c.bf16 %v466, %v466
      %s1529 = scalar_lea.vmem %s2, 12
      %v1530 = vld [vmem:[%s1529] sm:$0x3]
      %v1533 = vrot.slane %v1527, 2
      %v1534 = vsel %vm1354, %v1370, %v1533
      %v1535 = vrot.slane %v1528, 2
      %v1536 = vsel %vm1354, %v1533, %v1535
      %v1538 = vsel %vm557, %v1534, 0
      %v1541 = vsel %vm557, %v1536, 0
      %v1544 = vsel %vm585, %v1530, 0
      %1546 = vmatprep.subr.bf16.mxu0 0
      %1547 = vmatpush1.bf16.msra.mxu0 %v1544
      %1548 = vmatprep.subr.bf16.mxu0 0
      %1549 = vmatpush1.bf16.msra.mxu0 0
      %1550 = vmatprep.subr.bf16.mxu0 0
      %1551 = vmatpush1.bf16.msra.mxu0 0
      %1552 = vmatprep.subr.bf16.mxu0 0
      %1553 = vmatpush1.bf16.msra.mxu0 0
      %1554 = vmatprep.subr.bf16.mxu0 0
      %1555 = vmatpush1.bf16.msra.mxu0 0
      %1556 = vmatprep.subr.bf16.mxu0 0
      %1557 = vmatpush1.bf16.msra.mxu0 0
      %1558 = vmatprep.subr.bf16.mxu0 0
      %1559 = vmatpush1.bf16.msra.mxu0 0
      %1560 = vmatprep.subr.bf16.mxu0 0
      %1561 = vmatpush1.bf16.msra.mxu0 0
      %1562 = vmatprep.subr.bf16.mxu0 0
      %1563 = vmatpush1.bf16.msra.mxu0 0
      %1564 = vmatprep.subr.bf16.mxu0 0
      %1565 = vmatpush1.bf16.msra.mxu0 0
      %1566 = vmatprep.subr.bf16.mxu0 0
      %1567 = vmatpush1.bf16.msra.mxu0 0
      %1568 = vmatprep.subr.bf16.mxu0 0
      %1569 = vmatpush1.bf16.msra.mxu0 0
      %1570 = vmatprep.subr.bf16.mxu0 0
      %1571 = vmatpush1.bf16.msra.mxu0 0
      %1572 = vmatprep.subr.bf16.mxu0 0
      %1573 = vmatpush1.bf16.msra.mxu0 0
      %1574 = vmatprep.subr.bf16.mxu0 0
      %1575 = vmatpush1.bf16.msra.mxu0 0
      %1576 = vmatprep.subr.bf16.mxu0 0
      %1577 = vmatpush1.bf16.msra.mxu0 0
      %1578 = vmatprep.mubr.bf16.mxu0 0
      %1579 = vmatmul.mubr.bf16.gmra.mrb[0].mxu0 %v1378
      %v1580 = vpop.f32.mrb[0].mxu0
      %v1581 = vadd.f32 0.0, %v1580
      %v1582 = vpop.f32.mrb[0].mxu0
      %v1583 = vpop.f32.mrb[0].mxu0
      %v1584 = vadd.f32 0.0, %v1583
      %v1585 = vpop.f32.mrb[0].mxu0
      %1586 = vmatprep.mubr.bf16.mxu0 0
      %1587 = vmatmul.mubr.bf16.gmra.mrb[0].mxu0 %v1381
      %v1588 = vpop.f32.mrb[0].mxu0
      %v1589 = vadd.f32 0.0, %v1588
      %v1590 = vpop.f32.mrb[0].mxu0
      %v1591 = vpop.f32.mrb[0].mxu0
      %v1592 = vadd.f32 0.0, %v1591
      %v1593 = vpop.f32.mrb[0].mxu0
      %1594 = vmatprep.mubr.bf16.mxu0 0
      %1595 = vmatmul.mubr.bf16.gmra.mrb[0].mxu0 %v1384
      %v1596 = vpop.f32.mrb[0].mxu0
      %v1597 = vadd.f32 0.0, %v1596
      %v1598 = vpop.f32.mrb[0].mxu0
      %v1599 = vpop.f32.mrb[0].mxu0
      %v1600 = vadd.f32 0.0, %v1599
      %v1601 = vpop.f32.mrb[0].mxu0
      %1602 = vmatprep.mubr.bf16.mxu0 0
      %1603 = vmatmul.mubr.bf16.gmra.mrb[0].mxu0 %v1387
      %v1604 = vpop.f32.mrb[0].mxu0
      %v1605 = vadd.f32 0.0, %v1604
      %v1606 = vpop.f32.mrb[0].mxu0
      %v1607 = vpop.f32.mrb[0].mxu0
      %v1608 = vadd.f32 0.0, %v1607
      %v1609 = vpop.f32.mrb[0].mxu0
      %1610 = vmatprep.mubr.bf16.mxu0 0
      %1611 = vmatmul.mubr.bf16.gmra.mrb[0].mxu0 %v1390
      %v1612 = vpop.f32.mrb[0].mxu0
      %v1613 = vadd.f32 0.0, %v1612
      %v1614 = vpop.f32.mrb[0].mxu0
      %v1615 = vpop.f32.mrb[0].mxu0
      %v1616 = vadd.f32 0.0, %v1615
      %v1617 = vpop.f32.mrb[0].mxu0
      %1618 = vmatprep.mubr.bf16.mxu0 0
      %1619 = vmatmul.mubr.bf16.gmra.mrb[0].mxu0 %v1393
      %v1620 = vpop.f32.mrb[0].mxu0
      %v1621 = vadd.f32 0.0, %v1620
      %v1622 = vpop.f32.mrb[0].mxu0
      %v1623 = vpop.f32.mrb[0].mxu0
      %v1624 = vadd.f32 0.0, %v1623
      %v1625 = vpop.f32.mrb[0].mxu0
      %1626 = vmatprep.mubr.bf16.mxu0 0
      %1627 = vmatmul.mubr.bf16.gmra.mrb[0].mxu0 %v1396
      %v1628 = vpop.f32.mrb[0].mxu0
      %v1629 = vadd.f32 0.0, %v1628
      %v1630 = vpop.f32.mrb[0].mxu0
      %v1631 = vpop.f32.mrb[0].mxu0
      %v1632 = vadd.f32 0.0, %v1631
      %v1633 = vpop.f32.mrb[0].mxu0
      %1634 = vmatprep.mubr.bf16.mxu0 0
      %1635 = vmatmul.mubr.bf16.gmra.mrb[0].mxu0 %v1538
      %v1636 = vpop.f32.mrb[0].mxu0
      %v1637 = vadd.f32 0.0, %v1636
      %v1638 = vpop.f32.mrb[0].mxu0
      %v1639 = vpop.f32.mrb[0].mxu0
      %v1640 = vadd.f32 0.0, %v1639
      %v1641 = vpop.f32.mrb[0].mxu0
      %1642 = vmatprep.mubr.bf16.mxu0 0
      %1643 = vmatmul.mubr.bf16.gmra.mrb[0].mxu0 %v1541
      %v1644 = vpop.f32.mrb[0].mxu0
      %v1645 = vadd.f32 0.0, %v1644
      %v1646 = vpop.f32.mrb[0].mxu0
      %v1647 = vpop.f32.mrb[0].mxu0
      %v1648 = vadd.f32 0.0, %v1647
      %v1649 = vpop.f32.mrb[0].mxu0
      %1650 = vdwg.mxu0
      %v1651 = vadd.f32 %v1509, %v1581
      %v1652 = vadd.f32 %v1510, %v1584
      %v1653 = vadd.f32 %v1511, %v1589
      %v1654 = vadd.f32 %v1512, %v1592
      %v1655 = vadd.f32 %v1513, %v1597
      %v1656 = vadd.f32 %v1514, %v1600
      %v1657 = vadd.f32 %v1515, %v1605
      %v1658 = vadd.f32 %v1516, %v1608
      %v1659 = vadd.f32 %v1517, %v1613
      %v1660 = vadd.f32 %v1518, %v1616
      %v1661 = vadd.f32 %v1519, %v1621
      %v1662 = vadd.f32 %v1520, %v1624
      %v1663 = vadd.f32 %v1521, %v1629
      %v1664 = vadd.f32 %v1522, %v1632
      %v1665 = vadd.f32 %v1523, %v1637
      %v1666 = vadd.f32 %v1524, %v1640
      %v1667 = vadd.f32 %v1525, %v1645
      %v1668 = vadd.f32 %v1526, %v1648
      %s1669 = scalar_lea.vmem %s2, 14
      %v1670 = vld [vmem:[%s1669] sm:$0x3]
      %vm1671 = vsmask.f32 5376
      %v1672 = vrot.slane %v501, 2
      %v1673 = vrot.slane %v497, 3
      %v1674 = vor.u32 %v1672, %v1673
      %v1675 = vrot.slane %v509, 2
      %v1676 = vrot.slane %v505, 3
      %v1677 = vor.u32 %v1675, %v1676
      %v1678 = vsel %vm1671, %v1674, %v1677
      %v1679 = vrot.slane %v517, 2
      %v1680 = vrot.slane %v513, 3
      %v1681 = vor.u32 %v1679, %v1680
      %v1682 = vsel %vm1671, %v1677, %v1681
      %v1683 = vrot.slane %v525, 2
      %v1684 = vrot.slane %v521, 3
      %v1685 = vor.u32 %v1683, %v1684
      %v1686 = vsel %vm1671, %v1681, %v1685
      %v1687 = vrot.slane %v533, 2
      %v1688 = vrot.slane %v529, 3
      %v1689 = vor.u32 %v1687, %v1688
      %v1690 = vsel %vm1671, %v1685, %v1689
      %v1691 = vrot.slane %v541, 2
      %v1692 = vrot.slane %v537, 3
      %v1693 = vor.u32 %v1691, %v1692
      %v1694 = vsel %vm1671, %v1689, %v1693
      %v1695 = vrot.slane %v549, 2
      %v1696 = vrot.slane %v545, 3
      %v1697 = vor.u32 %v1695, %v1696
      %v1698 = vsel %vm1671, %v1693, %v1697
      %v1699 = vrot.slane %v1182, 2
      %v1700 = vrot.slane %v1185, 3
      %v1701 = vor.u32 %v1699, %v1700
      %v1702 = vsel %vm1671, %v1697, %v1701
      %v1704 = vshrl.u32 %v1527, 16
      %v1706 = vrot.slane %v1704, 2
      %v1707 = vshll.u32 %v1527, 16
      %v1709 = vrot.slane %v1707, 3
      %v1710 = vor.u32 %v1706, %v1709
      %v1711 = vsel %vm1671, %v1701, %v1710
      %v1713 = vshrl.u32 %v1528, 16
      %v1715 = vrot.slane %v1713, 2
      %v1716 = vshll.u32 %v1528, 16
      %v1718 = vrot.slane %v1716, 3
      %v1719 = vor.u32 %v1715, %v1718
      %v1720 = vsel %vm1671, %v1710, %v1719
      %v1722 = vsel %vm557, %v1678, 0
      %v1725 = vsel %vm557, %v1682, 0
      %v1728 = vsel %vm557, %v1686, 0
      %v1731 = vsel %vm557, %v1690, 0
      %v1734 = vsel %vm557, %v1694, 0
      %v1737 = vsel %vm557, %v1698, 0
      %v1740 = vsel %vm557, %v1702, 0
      %v1743 = vsel %vm557, %v1711, 0
      %v1746 = vsel %vm557, %v1720, 0
      %v1749 = vsel %vm585, %v1670, 0
      %1751 = vmatprep.subr.bf16.mxu0 0
      %1752 = vmatpush1.bf16.msra.mxu0 %v1749
      %1753 = vmatprep.subr.bf16.mxu0 0
      %1754 = vmatpush1.bf16.msra.mxu0 0
      %1755 = vmatprep.subr.bf16.mxu0 0
      %1756 = vmatpush1.bf16.msra.mxu0 0
      %1757 = vmatprep.subr.bf16.mxu0 0
      %1758 = vmatpush1.bf16.msra.mxu0 0
      %1759 = vmatprep.subr.bf16.mxu0 0
      %1760 = vmatpush1.bf16.msra.mxu0 0
      %1761 = vmatprep.subr.bf16.mxu0 0
      %1762 = vmatpush1.bf16.msra.mxu0 0
      %1763 = vmatprep.subr.bf16.mxu0 0
      %1764 = vmatpush1.bf16.msra.mxu0 0
      %1765 = vmatprep.subr.bf16.mxu0 0
      %1766 = vmatpush1.bf16.msra.mxu0 0
      %1767 = vmatprep.subr.bf16.mxu0 0
      %1768 = vmatpush1.bf16.msra.mxu0 0
      %1769 = vmatprep.subr.bf16.mxu0 0
      %1770 = vmatpush1.bf16.msra.mxu0 0
      %1771 = vmatprep.subr.bf16.mxu0 0
      %1772 = vmatpush1.bf16.msra.mxu0 0
      %1773 = vmatprep.subr.bf16.mxu0 0
      %1774 = vmatpush1.bf16.msra.mxu0 0
      %1775 = vmatprep.subr.bf16.mxu0 0
      %1776 = vmatpush1.bf16.msra.mxu0 0
      %1777 = vmatprep.subr.bf16.mxu0 0
      %1778 = vmatpush1.bf16.msra.mxu0 0
      %1779 = vmatprep.subr.bf16.mxu0 0
      %1780 = vmatpush1.bf16.msra.mxu0 0
      %1781 = vmatprep.subr.bf16.mxu0 0
      %1782 = vmatpush1.bf16.msra.mxu0 0
      %1783 = vmatprep.mubr.bf16.mxu0 0
      %1784 = vmatmul.mubr.bf16.gmra.mrb[0].mxu0 %v1722
      %v1785 = vpop.f32.mrb[0].mxu0
      %v1786 = vadd.f32 0.0, %v1785
      %v1787 = vpop.f32.mrb[0].mxu0
      %v1788 = vpop.f32.mrb[0].mxu0
      %v1789 = vadd.f32 0.0, %v1788
      %v1790 = vpop.f32.mrb[0].mxu0
      %1791 = vmatprep.mubr.bf16.mxu0 0
      %1792 = vmatmul.mubr.bf16.gmra.mrb[0].mxu0 %v1725
      %v1793 = vpop.f32.mrb[0].mxu0
      %v1794 = vadd.f32 0.0, %v1793
      %v1795 = vpop.f32.mrb[0].mxu0
      %v1796 = vpop.f32.mrb[0].mxu0
      %v1797 = vadd.f32 0.0, %v1796
      %v1798 = vpop.f32.mrb[0].mxu0
      %1799 = vmatprep.mubr.bf16.mxu0 0
      %1800 = vmatmul.mubr.bf16.gmra.mrb[0].mxu0 %v1728
      %v1801 = vpop.f32.mrb[0].mxu0
      %v1802 = vadd.f32 0.0, %v1801
      %v1803 = vpop.f32.mrb[0].mxu0
      %v1804 = vpop.f32.mrb[0].mxu0
      %v1805 = vadd.f32 0.0, %v1804
      %v1806 = vpop.f32.mrb[0].mxu0
      %1807 = vmatprep.mubr.bf16.mxu0 0
      %1808 = vmatmul.mubr.bf16.gmra.mrb[0].mxu0 %v1731
      %v1809 = vpop.f32.mrb[0].mxu0
      %v1810 = vadd.f32 0.0, %v1809
      %v1811 = vpop.f32.mrb[0].mxu0
      %v1812 = vpop.f32.mrb[0].mxu0
      %v1813 = vadd.f32 0.0, %v1812
      %v1814 = vpop.f32.mrb[0].mxu0
      %1815 = vmatprep.mubr.bf16.mxu0 0
      %1816 = vmatmul.mubr.bf16.gmra.mrb[0].mxu0 %v1734
      %v1817 = vpop.f32.mrb[0].mxu0
      %v1818 = vadd.f32 0.0, %v1817
      %v1819 = vpop.f32.mrb[0].mxu0
      %v1820 = vpop.f32.mrb[0].mxu0
      %v1821 = vadd.f32 0.0, %v1820
      %v1822 = vpop.f32.mrb[0].mxu0
      %1823 = vmatprep.mubr.bf16.mxu0 0
      %1824 = vmatmul.mubr.bf16.gmra.mrb[0].mxu0 %v1737
      %v1825 = vpop.f32.mrb[0].mxu0
      %v1826 = vadd.f32 0.0, %v1825
      %v1827 = vpop.f32.mrb[0].mxu0
      %v1828 = vpop.f32.mrb[0].mxu0
      %v1829 = vadd.f32 0.0, %v1828
      %v1830 = vpop.f32.mrb[0].mxu0
      %1831 = vmatprep.mubr.bf16.mxu0 0
      %1832 = vmatmul.mubr.bf16.gmra.mrb[0].mxu0 %v1740
      %v1833 = vpop.f32.mrb[0].mxu0
      %v1834 = vadd.f32 0.0, %v1833
      %v1835 = vpop.f32.mrb[0].mxu0
      %v1836 = vpop.f32.mrb[0].mxu0
      %v1837 = vadd.f32 0.0, %v1836
      %v1838 = vpop.f32.mrb[0].mxu0
      %1839 = vmatprep.mubr.bf16.mxu0 0
      %1840 = vmatmul.mubr.bf16.gmra.mrb[0].mxu0 %v1743
      %v1841 = vpop.f32.mrb[0].mxu0
      %v1842 = vadd.f32 0.0, %v1841
      %v1843 = vpop.f32.mrb[0].mxu0
      %v1844 = vpop.f32.mrb[0].mxu0
      %v1845 = vadd.f32 0.0, %v1844
      %v1846 = vpop.f32.mrb[0].mxu0
      %1847 = vmatprep.mubr.bf16.mxu0 0
      %1848 = vmatmul.mubr.bf16.gmra.mrb[0].mxu0 %v1746
      %v1849 = vpop.f32.mrb[0].mxu0
      %v1850 = vadd.f32 0.0, %v1849
      %v1851 = vpop.f32.mrb[0].mxu0
      %v1852 = vpop.f32.mrb[0].mxu0
      %v1853 = vadd.f32 0.0, %v1852
      %v1854 = vpop.f32.mrb[0].mxu0
      %1855 = vdwg.mxu0
      %v1856 = vadd.f32 %v1651, %v1786
      %v1857 = vadd.f32 %v1652, %v1789
      %v1858 = vadd.f32 %v1653, %v1794
      %v1859 = vadd.f32 %v1654, %v1797
      %v1860 = vadd.f32 %v1655, %v1802
      %v1861 = vadd.f32 %v1656, %v1805
      %v1862 = vadd.f32 %v1657, %v1810
      %v1863 = vadd.f32 %v1658, %v1813
      %v1864 = vadd.f32 %v1659, %v1818
      %v1865 = vadd.f32 %v1660, %v1821
      %v1866 = vadd.f32 %v1661, %v1826
      %v1867 = vadd.f32 %v1662, %v1829
      %v1868 = vadd.f32 %v1663, %v1834
      %v1869 = vadd.f32 %v1664, %v1837
      %v1870 = vadd.f32 %v1665, %v1842
      %v1871 = vadd.f32 %v1666, %v1845
      %v1872 = vadd.f32 %v1667, %v1850
      %v1873 = vadd.f32 %v1668, %v1853
      %s1874 = scalar_lea.vmem %s2, 16
      %v1875 = vld [vmem:[%s1874] sm:$0x3]
      %vm1876 = vcmask 1044480
      %v1877 = vrot.slane %v469, 3
      %v1878 = vrot.slane %v470, 3
      %v1879 = vsel %vm1876, %v1877, %v1878
      %v1880 = vrot.slane %v471, 3
      %v1881 = vsel %vm1876, %v1878, %v1880
      %v1882 = vrot.slane %v472, 3
      %v1883 = vsel %vm1876, %v1880, %v1882
      %v1884 = vrot.slane %v473, 3
      %v1885 = vsel %vm1876, %v1882, %v1884
      %v1886 = vrot.slane %v474, 3
      %v1887 = vsel %vm1876, %v1884, %v1886
      %v1888 = vrot.slane %v475, 3
      %v1889 = vsel %vm1876, %v1886, %v1888
      %v1890 = vrot.slane %v1005, 3
      %v1891 = vsel %vm1876, %v1888, %v1890
      %v1892 = vrot.slane %v1527, 3
      %v1893 = vsel %vm1876, %v1890, %v1892
      %v1894 = vrot.slane %v1528, 3
      %v1895 = vsel %vm1876, %v1892, %v1894
      %v1897 = vsel %vm557, %v1879, 0
      %v1900 = vsel %vm557, %v1881, 0
      %v1903 = vsel %vm557, %v1883, 0
      %v1906 = vsel %vm557, %v1885, 0
      %v1909 = vsel %vm557, %v1887, 0
      %v1912 = vsel %vm557, %v1889, 0
      %v1915 = vsel %vm557, %v1891, 0
      %v1918 = vsel %vm557, %v1893, 0
      %v1921 = vsel %vm557, %v1895, 0
      %v1924 = vsel %vm585, %v1875, 0
      %1926 = vmatprep.subr.bf16.mxu0 0
      %1927 = vmatpush1.bf16.msra.mxu0 %v1924
      %1928 = vmatprep.subr.bf16.mxu0 0
      %1929 = vmatpush1.bf16.msra.mxu0 0
      %1930 = vmatprep.subr.bf16.mxu0 0
      %1931 = vmatpush1.bf16.msra.mxu0 0
      %1932 = vmatprep.subr.bf16.mxu0 0
      %1933 = vmatpush1.bf16.msra.mxu0 0
      %1934 = vmatprep.subr.bf16.mxu0 0
      %1935 = vmatpush1.bf16.msra.mxu0 0
      %1936 = vmatprep.subr.bf16.mxu0 0
      %1937 = vmatpush1.bf16.msra.mxu0 0
      %1938 = vmatprep.subr.bf16.mxu0 0
      %1939 = vmatpush1.bf16.msra.mxu0 0
      %1940 = vmatprep.subr.bf16.mxu0 0
      %1941 = vmatpush1.bf16.msra.mxu0 0
      %1942 = vmatprep.subr.bf16.mxu0 0
      %1943 = vmatpush1.bf16.msra.mxu0 0
      %1944 = vmatprep.subr.bf16.mxu0 0
      %1945 = vmatpush1.bf16.msra.mxu0 0
      %1946 = vmatprep.subr.bf16.mxu0 0
      %1947 = vmatpush1.bf16.msra.mxu0 0
      %1948 = vmatprep.subr.bf16.mxu0 0
      %1949 = vmatpush1.bf16.msra.mxu0 0
      %1950 = vmatprep.subr.bf16.mxu0 0
      %1951 = vmatpush1.bf16.msra.mxu0 0
      %1952 = vmatprep.subr.bf16.mxu0 0
      %1953 = vmatpush1.bf16.msra.mxu0 0
      %1954 = vmatprep.subr.bf16.mxu0 0
      %1955 = vmatpush1.bf16.msra.mxu0 0
      %1956 = vmatprep.subr.bf16.mxu0 0
      %1957 = vmatpush1.bf16.msra.mxu0 0
      %1958 = vmatprep.mubr.bf16.mxu0 0
      %1959 = vmatmul.mubr.bf16.gmra.mrb[0].mxu0 %v1897
      %v1960 = vpop.f32.mrb[0].mxu0
      %v1961 = vadd.f32 0.0, %v1960
      %v1962 = vpop.f32.mrb[0].mxu0
      %v1963 = vpop.f32.mrb[0].mxu0
      %v1964 = vadd.f32 0.0, %v1963
      %v1965 = vpop.f32.mrb[0].mxu0
      %1966 = vmatprep.mubr.bf16.mxu0 0
      %1967 = vmatmul.mubr.bf16.gmra.mrb[0].mxu0 %v1900
      %v1968 = vpop.f32.mrb[0].mxu0
      %v1969 = vadd.f32 0.0, %v1968
      %v1970 = vpop.f32.mrb[0].mxu0
      %v1971 = vpop.f32.mrb[0].mxu0
      %v1972 = vadd.f32 0.0, %v1971
      %v1973 = vpop.f32.mrb[0].mxu0
      %1974 = vmatprep.mubr.bf16.mxu0 0
      %1975 = vmatmul.mubr.bf16.gmra.mrb[0].mxu0 %v1903
      %v1976 = vpop.f32.mrb[0].mxu0
      %v1977 = vadd.f32 0.0, %v1976
      %v1978 = vpop.f32.mrb[0].mxu0
      %v1979 = vpop.f32.mrb[0].mxu0
      %v1980 = vadd.f32 0.0, %v1979
      %v1981 = vpop.f32.mrb[0].mxu0
      %1982 = vmatprep.mubr.bf16.mxu0 0
      %1983 = vmatmul.mubr.bf16.gmra.mrb[0].mxu0 %v1906
      %v1984 = vpop.f32.mrb[0].mxu0
      %v1985 = vadd.f32 0.0, %v1984
      %v1986 = vpop.f32.mrb[0].mxu0
      %v1987 = vpop.f32.mrb[0].mxu0
      %v1988 = vadd.f32 0.0, %v1987
      %v1989 = vpop.f32.mrb[0].mxu0
      %1990 = vmatprep.mubr.bf16.mxu0 0
      %1991 = vmatmul.mubr.bf16.gmra.mrb[0].mxu0 %v1909
      %v1992 = vpop.f32.mrb[0].mxu0
      %v1993 = vadd.f32 0.0, %v1992
      %v1994 = vpop.f32.mrb[0].mxu0
      %v1995 = vpop.f32.mrb[0].mxu0
      %v1996 = vadd.f32 0.0, %v1995
      %v1997 = vpop.f32.mrb[0].mxu0
      %1998 = vmatprep.mubr.bf16.mxu0 0
      %1999 = vmatmul.mubr.bf16.gmra.mrb[0].mxu0 %v1912
      %v2000 = vpop.f32.mrb[0].mxu0
      %v2001 = vadd.f32 0.0, %v2000
      %v2002 = vpop.f32.mrb[0].mxu0
      %v2003 = vpop.f32.mrb[0].mxu0
      %v2004 = vadd.f32 0.0, %v2003
      %v2005 = vpop.f32.mrb[0].mxu0
      %2006 = vmatprep.mubr.bf16.mxu0 0
      %2007 = vmatmul.mubr.bf16.gmra.mrb[0].mxu0 %v1915
      %v2008 = vpop.f32.mrb[0].mxu0
      %v2009 = vadd.f32 0.0, %v2008
      %v2010 = vpop.f32.mrb[0].mxu0
      %v2011 = vpop.f32.mrb[0].mxu0
      %v2012 = vadd.f32 0.0, %v2011
      %v2013 = vpop.f32.mrb[0].mxu0
      %2014 = vmatprep.mubr.bf16.mxu0 0
      %2015 = vmatmul.mubr.bf16.gmra.mrb[0].mxu0 %v1918
      %v2016 = vpop.f32.mrb[0].mxu0
      %v2017 = vadd.f32 0.0, %v2016
      %v2018 = vpop.f32.mrb[0].mxu0
      %v2019 = vpop.f32.mrb[0].mxu0
      %v2020 = vadd.f32 0.0, %v2019
      %v2021 = vpop.f32.mrb[0].mxu0
      %2022 = vmatprep.mubr.bf16.mxu0 0
      %2023 = vmatmul.mubr.bf16.gmra.mrb[0].mxu0 %v1921
      %v2024 = vpop.f32.mrb[0].mxu0
      %v2025 = vadd.f32 0.0, %v2024
      %v2026 = vpop.f32.mrb[0].mxu0
      %v2027 = vpop.f32.mrb[0].mxu0
      %v2028 = vadd.f32 0.0, %v2027
      %v2029 = vpop.f32.mrb[0].mxu0
      %2030 = vdwg.mxu0
      %v2031 = vadd.f32 %v1856, %v1961
      %v2032 = vadd.f32 %v1857, %v1964
      %v2033 = vadd.f32 %v1858, %v1969
      %v2034 = vadd.f32 %v1859, %v1972
      %v2035 = vadd.f32 %v1860, %v1977
      %v2036 = vadd.f32 %v1861, %v1980
      %v2037 = vadd.f32 %v1862, %v1985
      %v2038 = vadd.f32 %v1863, %v1988
      %v2039 = vadd.f32 %v1864, %v1993
      %v2040 = vadd.f32 %v1865, %v1996
      %v2041 = vadd.f32 %v1866, %v2001
      %v2042 = vadd.f32 %v1867, %v2004
      %v2043 = vadd.f32 %v1868, %v2009
      %v2044 = vadd.f32 %v1869, %v2012
      %v2045 = vadd.f32 %v1870, %v2017
      %v2046 = vadd.f32 %v1871, %v2020
      %v2047 = vadd.f32 %v1872, %v2025
      %v2048 = vadd.f32 %v1873, %v2028
      %v2049 = vpack.c.bf16 %v2032, %v2031
      %v2050 = vpack.c.bf16 %v2034, %v2033
      %v2051 = vpack.c.bf16 %v2036, %v2035
      %v2052 = vpack.c.bf16 %v2038, %v2037
      %v2053 = vpack.c.bf16 %v2040, %v2039
      %v2054 = vpack.c.bf16 %v2042, %v2041
      %v2055 = vpack.c.bf16 %v2044, %v2043
      %v2056 = vpack.c.bf16 %v2046, %v2045
      %v2057 = vpack.c.bf16 %v2048, %v2047
      %v2067 = vunpack.c.l.b16 %v2049
      %v2068 = vunpack.c.h.b16 %v2049
      %v2069 = vunpack.c.l.b16 %v2050
      %v2070 = vunpack.c.h.b16 %v2050
      %v2071 = vunpack.c.l.b16 %v2051
      %v2072 = vunpack.c.h.b16 %v2051
      %v2073 = vunpack.c.l.b16 %v2052
      %v2074 = vunpack.c.h.b16 %v2052
      %v2075 = vunpack.c.l.b16 %v2053
      %v2076 = vunpack.c.h.b16 %v2053
      %v2077 = vunpack.c.l.b16 %v2054
      %v2078 = vunpack.c.h.b16 %v2054
      %v2079 = vunpack.c.l.b16 %v2055
      %v2080 = vunpack.c.h.b16 %v2055
      %v2081 = vunpack.c.l.b16 %v2056
      %v2082 = vunpack.c.h.b16 %v2056
      %v2083 = vunpack.c.l.b16 %v2057
      %v2084 = vunpack.c.h.b16 %v2057
      %v2085 = vpack.c.b16 %v2067, %v2067
      %v2086 = vpack.c.b16 %v2068, %v2068
      %v2087 = vpack.c.b16 %v2069, %v2069
      %v2088 = vpack.c.b16 %v2070, %v2070
      %v2089 = vpack.c.b16 %v2071, %v2071
      %v2090 = vpack.c.b16 %v2072, %v2072
      %v2091 = vpack.c.b16 %v2073, %v2073
      %v2092 = vpack.c.b16 %v2074, %v2074
      %v2093 = vpack.c.b16 %v2075, %v2075
      %v2094 = vpack.c.b16 %v2076, %v2076
      %v2095 = vpack.c.b16 %v2077, %v2077
      %v2096 = vpack.c.b16 %v2078, %v2078
      %v2097 = vpack.c.b16 %v2079, %v2079
      %v2098 = vpack.c.b16 %v2080, %v2080
      %v2099 = vpack.c.b16 %v2081, %v2081
      %v2100 = vpack.c.b16 %v2082, %v2082
      %v2101 = vpack.c.b16 %v2083, %v2083
      %v2102 = vpack.c.b16 %v2084, %v2084
      %2121 = vst [vmem:[%s404] sm:$0xf] %v2085
      %2122 = vst [vmem:[%s404 + $0x4] sm:$0xf] %v2086
      %2123 = vst [vmem:[%s404 + $0x8] sm:$0xf] %v2087
      %2124 = vst [vmem:[%s404 + $0xc] sm:$0xf] %v2088
      %2125 = vst [vmem:[%s404 + $0x10] sm:$0xf] %v2089
      %2126 = vst [vmem:[%s404 + $0x14] sm:$0xf] %v2090
      %2127 = vst [vmem:[%s404 + $0x18] sm:$0xf] %v2091
      %2128 = vst [vmem:[%s404 + $0x1c] sm:$0xf] %v2092
      %2129 = vst [vmem:[%s404 + $0x20] sm:$0xf] %v2093
      %2130 = vst [vmem:[%s404 + $0x24] sm:$0xf] %v2094
      %2131 = vst [vmem:[%s404 + $0x28] sm:$0xf] %v2095
      %2132 = vst [vmem:[%s404 + $0x2c] sm:$0xf] %v2096
      %2133 = vst [vmem:[%s404 + $0x30] sm:$0xf] %v2097
      %2134 = vst [vmem:[%s404 + $0x34] sm:$0xf] %v2098
      %2135 = vst [vmem:[%s404 + $0x38] sm:$0xf] %v2099
      %2136 = vst [vmem:[%s404 + $0x3c] sm:$0xf] %v2100
      %2137 = vst [vmem:[%s404 + $0x40] sm:$0xf] %v2101
      %2138 = vst [vmem:[%s404 + $0x44] sm:$0xf] %v2102
      %v2139 = vld [vmem:[%s3] sm:$0x1]
      %v2141 = vlaneseq
      %v2142 = vshrl.u32 %v2141, 7
      %v2143 = vsub.s32 0, %v2142
      %v2144 = vrot.slane %v2139, %v2143
      %v2146 = vsub.f32 %v2031, %v2144
      %v2147 = vsub.f32 %v2032, %v2144
      %v2148 = vsub.f32 %v2033, %v2144
      %v2149 = vsub.f32 %v2034, %v2144
      %v2150 = vsub.f32 %v2035, %v2144
      %v2151 = vsub.f32 %v2036, %v2144
      %v2152 = vsub.f32 %v2037, %v2144
      %v2153 = vsub.f32 %v2038, %v2144
      %v2154 = vsub.f32 %v2039, %v2144
      %v2155 = vsub.f32 %v2040, %v2144
      %v2156 = vsub.f32 %v2041, %v2144
      %v2157 = vsub.f32 %v2042, %v2144
      %v2158 = vsub.f32 %v2043, %v2144
      %v2159 = vsub.f32 %v2044, %v2144
      %v2160 = vsub.f32 %v2045, %v2144
      %v2161 = vsub.f32 %v2046, %v2144
      %v2162 = vsub.f32 %v2047, %v2144
      %v2163 = vsub.f32 %v2048, %v2144
      %v2164 = vld [vmem:[%s394] sm:$0xff]
      %v2165 = vld [vmem:[%s394 + $0x8] sm:$0xff]
      %v2166 = vld [vmem:[%s394 + $0x10] sm:$0xff]
      %v2167 = vld [vmem:[%s394 + $0x18] sm:$0xff]
      %v2168 = vld [vmem:[%s394 + $0x20] sm:$0xff]
      %v2169 = vld [vmem:[%s394 + $0x28] sm:$0xff]
      %v2170 = vld [vmem:[%s394 + $0x30] sm:$0xff]
      %v2171 = vld [vmem:[%s394 + $0x38] sm:$0xff]
      %v2172 = vld [vmem:[%s394 + $0x40] sm:$0xff]
      %v2173 = vld [vmem:[%s394 + $0x48] sm:$0xff]
      %v2174 = vld [vmem:[%s394 + $0x50] sm:$0xff]
      %v2175 = vld [vmem:[%s394 + $0x58] sm:$0xff]
      %v2176 = vld [vmem:[%s394 + $0x60] sm:$0xff]
      %v2177 = vld [vmem:[%s394 + $0x68] sm:$0xff]
      %v2178 = vld [vmem:[%s394 + $0x70] sm:$0xff]
      %v2179 = vld [vmem:[%s394 + $0x78] sm:$0xff]
      %v2180 = vld [vmem:[%s394 + $0x80] sm:$0xff]
      %v2181 = vld [vmem:[%s394 + $0x88] sm:$0xff]
      %2183 = vset.pattern.permute.xlu0 0
      %2184 = vperm.xlu0 %2183, %v2164
      %v2185 = vpop.permute.xlu0 %2184
      %2188 = vset.pattern.permute.xlu0 0
      %2189 = vperm.xlu0 %2188, %v2165
      %v2190 = vpop.permute.xlu0 %2189
      %2193 = vset.pattern.permute.xlu0 0
      %2194 = vperm.xlu0 %2193, %v2166
      %v2195 = vpop.permute.xlu0 %2194
      %2198 = vset.pattern.permute.xlu0 0
      %2199 = vperm.xlu0 %2198, %v2167
      %v2200 = vpop.permute.xlu0 %2199
      %2203 = vset.pattern.permute.xlu0 0
      %2204 = vperm.xlu0 %2203, %v2168
      %v2205 = vpop.permute.xlu0 %2204
      %2208 = vset.pattern.permute.xlu0 0
      %2209 = vperm.xlu0 %2208, %v2169
      %v2210 = vpop.permute.xlu0 %2209
      %2213 = vset.pattern.permute.xlu0 0
      %2214 = vperm.xlu0 %2213, %v2170
      %v2215 = vpop.permute.xlu0 %2214
      %2218 = vset.pattern.permute.xlu0 0
      %2219 = vperm.xlu0 %2218, %v2171
      %v2220 = vpop.permute.xlu0 %2219
      %2223 = vset.pattern.permute.xlu0 0
      %2224 = vperm.xlu0 %2223, %v2172
      %v2225 = vpop.permute.xlu0 %2224
      %2228 = vset.pattern.permute.xlu0 0
      %2229 = vperm.xlu0 %2228, %v2173
      %v2230 = vpop.permute.xlu0 %2229
      %2233 = vset.pattern.permute.xlu0 0
      %2234 = vperm.xlu0 %2233, %v2174
      %v2235 = vpop.permute.xlu0 %2234
      %2238 = vset.pattern.permute.xlu0 0
      %2239 = vperm.xlu0 %2238, %v2175
      %v2240 = vpop.permute.xlu0 %2239
      %2243 = vset.pattern.permute.xlu0 0
      %2244 = vperm.xlu0 %2243, %v2176
      %v2245 = vpop.permute.xlu0 %2244
      %2248 = vset.pattern.permute.xlu0 0
      %2249 = vperm.xlu0 %2248, %v2177
      %v2250 = vpop.permute.xlu0 %2249
      %2253 = vset.pattern.permute.xlu0 0
      %2254 = vperm.xlu0 %2253, %v2178
      %v2255 = vpop.permute.xlu0 %2254
      %2258 = vset.pattern.permute.xlu0 0
      %2259 = vperm.xlu0 %2258, %v2179
      %v2260 = vpop.permute.xlu0 %2259
      %2263 = vset.pattern.permute.xlu0 0
      %2264 = vperm.xlu0 %2263, %v2180
      %v2265 = vpop.permute.xlu0 %2264
      %2268 = vset.pattern.permute.xlu0 0
      %2269 = vperm.xlu0 %2268, %v2181
      %v2270 = vpop.permute.xlu0 %2269
      %v2272 = vmul.f32 %v2146, %v2185
      %v2273 = vmul.f32 %v2147, %v2190
      %v2274 = vmul.f32 %v2148, %v2195
      %v2275 = vmul.f32 %v2149, %v2200
      %v2276 = vmul.f32 %v2150, %v2205
      %v2277 = vmul.f32 %v2151, %v2210
      %v2278 = vmul.f32 %v2152, %v2215
      %v2279 = vmul.f32 %v2153, %v2220
      %v2280 = vmul.f32 %v2154, %v2225
      %v2281 = vmul.f32 %v2155, %v2230
      %v2282 = vmul.f32 %v2156, %v2235
      %v2283 = vmul.f32 %v2157, %v2240
      %v2284 = vmul.f32 %v2158, %v2245
      %v2285 = vmul.f32 %v2159, %v2250
      %v2286 = vmul.f32 %v2160, %v2255
      %v2287 = vmul.f32 %v2161, %v2260
      %v2288 = vmul.f32 %v2162, %v2265
      %v2289 = vmul.f32 %v2163, %v2270
      %v2290 = vld [vmem:[%s410] sm:$0x1]
      %v2291 = vadd.f32 %v2272, %v2273
      %v2292 = vadd.f32 %v2291, %v2274
      %v2293 = vadd.f32 %v2292, %v2275
      %v2294 = vadd.f32 %v2293, %v2276
      %v2295 = vadd.f32 %v2294, %v2277
      %v2296 = vadd.f32 %v2295, %v2278
      %v2297 = vadd.f32 %v2296, %v2279
      %v2298 = vadd.f32 %v2297, %v2280
      %v2299 = vadd.f32 %v2298, %v2281
      %v2300 = vadd.f32 %v2299, %v2282
      %v2301 = vadd.f32 %v2300, %v2283
      %v2302 = vadd.f32 %v2301, %v2284
      %v2303 = vadd.f32 %v2302, %v2285
      %v2304 = vadd.f32 %v2303, %v2286
      %v2305 = vadd.f32 %v2304, %v2287
      %v2306 = vadd.f32 %v2305, %v2288
      %v2307 = vadd.f32 %v2306, %v2289
      %v2308 = vrot.slane %v2307, 4
      %v2309 = vadd.f32 %v2307, %v2308
      %v2310 = vrot.slane %v2309, 2
      %v2311 = vadd.f32 %v2309, %v2310
      %v2312 = vrot.slane %v2311, 1
      %v2313 = vadd.f32 %v2311, %v2312
      %v2314 = vadd.f32 %v2290, %v2313
      %2315 = vst [vmem:[%s410] sm:$0x1] %v2314
      %v2316 = vld [vmem:[%s413] sm:$0x1]
      %v2317 = vmul.f32 %v2272, %v2272
      %v2318 = vmul.f32 %v2273, %v2273
      %v2319 = vmul.f32 %v2274, %v2274
      %v2320 = vmul.f32 %v2275, %v2275
      %v2321 = vmul.f32 %v2276, %v2276
      %v2322 = vmul.f32 %v2277, %v2277
      %v2323 = vmul.f32 %v2278, %v2278
      %v2324 = vmul.f32 %v2279, %v2279
      %v2325 = vmul.f32 %v2280, %v2280
      %v2326 = vmul.f32 %v2281, %v2281
      %v2327 = vmul.f32 %v2282, %v2282
      %v2328 = vmul.f32 %v2283, %v2283
      %v2329 = vmul.f32 %v2284, %v2284
      %v2330 = vmul.f32 %v2285, %v2285
      %v2331 = vmul.f32 %v2286, %v2286
      %v2332 = vmul.f32 %v2287, %v2287
      %v2333 = vmul.f32 %v2288, %v2288
      %v2334 = vmul.f32 %v2289, %v2289
      %v2335 = vadd.f32 %v2317, %v2318
      %v2336 = vadd.f32 %v2335, %v2319
      %v2337 = vadd.f32 %v2336, %v2320
      %v2338 = vadd.f32 %v2337, %v2321
      %v2339 = vadd.f32 %v2338, %v2322
      %v2340 = vadd.f32 %v2339, %v2323
      %v2341 = vadd.f32 %v2340, %v2324
      %v2342 = vadd.f32 %v2341, %v2325
      %v2343 = vadd.f32 %v2342, %v2326
      %v2344 = vadd.f32 %v2343, %v2327
      %v2345 = vadd.f32 %v2344, %v2328
      %v2346 = vadd.f32 %v2345, %v2329
      %v2347 = vadd.f32 %v2346, %v2330
      %v2348 = vadd.f32 %v2347, %v2331
      %v2349 = vadd.f32 %v2348, %v2332
      %v2350 = vadd.f32 %v2349, %v2333
      %v2351 = vadd.f32 %v2350, %v2334
      %v2352 = vrot.slane %v2351, 4
      %v2353 = vadd.f32 %v2351, %v2352
      %v2354 = vrot.slane %v2353, 2
      %v2355 = vadd.f32 %v2353, %v2354
      %v2356 = vrot.slane %v2355, 1
      %v2357 = vadd.f32 %v2355, %v2356
      %v2358 = vadd.f32 %v2316, %v2357
      %2359 = vst [vmem:[%s413] sm:$0x1] %v2358
      %s2360 = smul.u32 %s23, 2
      %s2361 = sadd.s32 %s2360, %s24
      %s2362 = smul.u32 18, %s2361
      %p2363 = scmp.lt.s32.totalorder %s2362, 71
      %s2364 = scalar_select %p2363, %s2362, 71
      %s2365 = smul.addr %s2364, 4
      %s2366 = scalar_lea.vmem %s5, %s2365
      %p2367 = scmp.lt.s32.totalorder %s23, 1
      %s2368 = scalar_select %p2367, %s23, 1
      %s2369 = scalar_lea.vmem %s6, %s2368
      %p2370 = scmp.lt.s32.totalorder %s23, 1
      %s2371 = scalar_select %p2370, %s23, 1
      %s2372 = scalar_lea.vmem %s7, %s2371
      // Predicated region
      $region45: #{cna_forward.2} parent=39 // pred_check
        %p2373 = pneg %p187
      $region46: #{cna_forward.2} parent=39 // pred_check_branch
        %2375 = sbr.rel (%p2373) target = $region48
      $region47: #{cna_forward.2} parent=39 // pred_region
        %s2376 = smul.u32 %s23, 2
        %s2377 = sadd.s32 %s2376, %s24
        %s2378 = smul.u32 18, %s2377
      $region48: #{cna_forward.2} parent=39 // pred_fallthru
        _
      // Predicated region
      $region49: #{cna_forward.2} parent=39 // pred_check
        %p2379 = pneg %p213
      $region50: #{cna_forward.2} parent=39 // pred_check_branch
        %2381 = sbr.rel (%p2379) target = $region52
      $region51: #{cna_forward.2} parent=39 // pred_region
        _
      $region52: #{cna_forward.2} parent=39 // pred_fallthru
        _
      // Predicated region
      $region53: #{cna_forward.2} parent=39 // pred_check
        %p2382 = pneg %p239
      $region54: #{cna_forward.2} parent=39 // pred_check_branch
        %2384 = sbr.rel (%p2382) target = $region56
      $region55: #{cna_forward.2} parent=39 // pred_region
        _
      $region56: #{cna_forward.2} parent=39 // pred_fallthru
        _
    $region40: #{cna_forward.2} parent=5 // pred_fallthru
      _
    %p2385 = scmp.le.s32.totalorder 2, %s14
    // Predicated region
    $region57: #{cna_forward.2} parent=5 // pred_check
      %p2386 = pneg %p2385
    $region58: #{cna_forward.2} parent=5 // pred_check_branch
      %2388 = sbr.rel (%p2386) target = $region60
    $region59: #{cna_forward.2} parent=5 // pred_region
      %s2389 = ssub.s32 %s14, 2
      // Predicated region
      $region61: #{cna_forward.2} parent=59 // pred_check
        %p2390 = pneg %p193
      $region62: #{cna_forward.2} parent=59 // pred_check_branch
        %2392 = sbr.rel (%p2390) target = $region64
      $region63: #{cna_forward.2} parent=59 // pred_region
        %s2393 = smul.u32 %s25, 2
        %s2394 = sadd.s32 %s2393, %s26
        %s2395 = smul.u32 18, %s2394
        %p2396 = scmp.lt.s32.totalorder %s2395, 71
        %s2397 = scalar_select %p2396, %s2395, 71
        %s2398 = smul.addr %s2397, 4
        %s2399 = scalar_lea.vmem %s5, %s2398
      $region64: #{cna_forward.2} parent=59 // pred_fallthru
        _
      // Predicated region
      $region65: #{cna_forward.2} parent=59 // pred_check
        %p2400 = pneg %p219
      $region66: #{cna_forward.2} parent=59 // pred_check_branch
        %2402 = sbr.rel (%p2400) target = $region68
      $region67: #{cna_forward.2} parent=59 // pred_region
        %p2403 = scmp.lt.s32.totalorder %s25, 1
        %s2404 = scalar_select %p2403, %s25, 1
        %s2405 = scalar_lea.vmem %s6, %s2404
      $region68: #{cna_forward.2} parent=59 // pred_fallthru
        _
      // Predicated region
      $region69: #{cna_forward.2} parent=59 // pred_check
        %p2406 = pneg %p245
      $region70: #{cna_forward.2} parent=59 // pred_check_branch
        %2408 = sbr.rel (%p2406) target = $region72
      $region71: #{cna_forward.2} parent=59 // pred_region
        %p2409 = scmp.lt.s32.totalorder %s25, 1
        %s2410 = scalar_select %p2409, %s25, 1
        %s2411 = scalar_lea.vmem %s7, %s2410
      $region72: #{cna_forward.2} parent=59 // pred_fallthru
        _
    $region60: #{cna_forward.2} parent=5 // pred_fallthru
      _
  $region6: #{cna_forward.2} parent=0 // loop_footer
    %s18 = sadd.s32 1, %s14
  $region7: #{cna_forward.2} parent=0 // loop_footer_branch
    %13 = sbr.rel target = $region3
  $region8: #{cna_forward.2} parent=0 // loop_exit
    _

</llo_original>
